<compile_context>
chip_gen: v7x
topology: tpu7x:2x2x1
jax: 0.10.0
libtpu: 0.0.40
codegen_flags: <defaults>
</compile_context>

<pallas_src>
import functools

import jax
import jax.numpy as jnp
from jax.experimental import pallas as pl
from jax.experimental.pallas import tpu as pltpu


def _mapping_kernel(x_ref, w_ref, b_ref, o_ref, h_ref, *, negative_slope):
    # x_ref: (TB, D)      input tile (constant along the layer grid axis)
    # w_ref: (1, D, D)    current layer's weight (in x out), streamed per layer
    # b_ref: (1, 1, D)    current layer's bias (f32)
    # o_ref: (TB, D)      output tile (written only on the last layer)
    # h_ref: (TB, D) f32  scratch holding the running activation
    l = pl.program_id(1)

    @pl.when(l == 0)
    def _init():
        h_ref[...] = x_ref[...].astype(jnp.float32)

    # bf16 (or weight-dtype) matmul with f32 accumulation on the MXU.
    y = jnp.dot(
        h_ref[...].astype(w_ref.dtype),
        w_ref[0],
        preferred_element_type=jnp.float32,
    )
    y = y + b_ref[0].astype(jnp.float32)
    # LeakyReLU(negative_slope)
    h_ref[...] = jnp.where(y >= 0, y, negative_slope * y)

    @pl.when(l == pl.num_programs(1) - 1)
    def _finalize():
        o_ref[...] = h_ref[...].astype(o_ref.dtype)


def mapping_net(x, w_stack, b_stack, *, negative_slope=0.01, tile_b=None):
    """Fused StyleGAN mapping network.

    x:       (B, D) activations (f32)
    w_stack: (L, D, D) per-layer weights, already transposed to (in x out).
             Pass bf16 for best throughput; f32 also works.
    b_stack: (L, 1, D) per-layer biases (f32).
    """
    B, D = x.shape
    L, d_in, d_out = w_stack.shape
    assert d_in == D and d_out == D, "square mapping layers expected"
    assert b_stack.shape == (L, 1, D)

    if tile_b is None:
        tile_b = min(128, B)
    assert B % tile_b == 0, "batch must be divisible by tile_b"
    assert tile_b % 8 == 0, "f32 activations need a multiple-of-8 batch tile"

    kernel = functools.partial(_mapping_kernel, negative_slope=negative_slope)

    return pl.pallas_call(
        kernel,
        out_shape=jax.ShapeDtypeStruct((B, D), x.dtype),
        grid_spec=pltpu.PrefetchScalarGridSpec(
            num_scalar_prefetch=0,
            grid=(B // tile_b, L),  # batch tiles outer (parallel), layers inner
            in_specs=[
                # x tile: constant along the layer axis -> fetched once per tile.
                pl.BlockSpec((tile_b, D), lambda i, l: (i, 0)),
                # one layer's weights per grid step -> streamed / prefetched.
                pl.BlockSpec((1, D, D), lambda i, l: (l, 0, 0)),
                # one layer's bias per grid step.
                pl.BlockSpec((1, 1, D), lambda i, l: (l, 0, 0)),
            ],
            # Output block index is constant across the layer axis -> resident
            # accumulator semantics; written once at the last layer.
            out_specs=pl.BlockSpec((tile_b, D), lambda i, l: (i, 0)),
            scratch_shapes=[pltpu.VMEM((tile_b, D), jnp.float32)],
        ),
        compiler_params=pltpu.CompilerParams(
            dimension_semantics=("parallel", "arbitrary"),
        ),
    )(x, w_stack, b_stack)


def _reference(x, w_stack, b_stack, negative_slope=0.01):
    """Pure-JAX reference using the same numerical recipe (bf16 inputs to the
    matmul if w_stack is bf16, f32 accumulation)."""
    h = x.astype(jnp.float32)
    for l in range(w_stack.shape[0]):
        y = jnp.dot(
            h.astype(w_stack.dtype), w_stack[l], preferred_element_type=jnp.float32
        )
        y = y + b_stack[l].astype(jnp.float32)
        h = jnp.where(y >= 0, y, negative_slope * y)
    return h.astype(x.dtype)


if __name__ == "__main__":
    IN_FEATURES = 512   # module default (in_features = out_features = 512)
    NUM_LAYERS = 8      # 8 x (Linear + LeakyReLU)
    BATCH = 256         # -> 2 batch tiles of 128 rows
    NEG_SLOPE = 0.01    # nn.LeakyReLU default, matches the module

    key = jax.random.PRNGKey(0)
    kx, kw, kb = jax.random.split(key, 3)

    # Deterministic synthetic parameters (shapes match nn.Linear(512, 512)).
    # PyTorch stores W as (out, in); we store the transposed (in, out) stack.
    w_stack_f32 = (
        jax.random.normal(kw, (NUM_LAYERS, IN_FEATURES, IN_FEATURES), jnp.float32)
        * (1.0 / jnp.sqrt(IN_FEATURES))
    )
    b_stack = (
        jax.random.normal(kb, (NUM_LAYERS, 1, IN_FEATURES), jnp.float32) * 0.01
    )
    # bf16 weights for MXU-native throughput; accumulation stays f32 in-kernel.
    w_stack = w_stack_f32.astype(jnp.bfloat16)

    x = jax.random.normal(kx, (BATCH, IN_FEATURES), jnp.float32)

    out = mapping_net(x, w_stack, b_stack, negative_slope=NEG_SLOPE)
    out = jax.block_until_ready(out)

    ref = _reference(x, w_stack, b_stack, NEG_SLOPE)
    assert out.shape == (BATCH, IN_FEATURES)
    assert jnp.allclose(out, ref, atol=1e-2, rtol=1e-2), "mismatch vs reference"

    print("KERNEL_OK")
</pallas_src>

<mosaic_0001>
module attributes {stable_mosaic.version = 11 : i64} {
  func.func @_mapping_kernel(%arg0: i32, %arg1: i32, %arg2: memref<128x512xf32, #tpu.memory_space<vmem>>, %arg3: memref<1x512x512xbf16, #tpu.memory_space<vmem>>, %arg4: memref<1x1x512xf32, #tpu.memory_space<vmem>>, %arg5: memref<128x512xf32, #tpu.memory_space<vmem>>, %arg6: memref<128x512xf32, #tpu.memory_space<vmem>>) attributes {dimension_semantics = [#tpu.dimension_semantics<parallel>, #tpu.dimension_semantics<arbitrary>], iteration_bounds = array<i64: 2, 8>, scalar_prefetch = 0 : i64, scratch_operands = 1 : i64, tpu.core_type = #tpu.core_type<tc>, window_params = [{transform_indices = @transform_0, window_bounds = array<i64: 128, 512>}, {transform_indices = @transform_1, window_bounds = array<i64: 1, 512, 512>}, {transform_indices = @transform_2, window_bounds = array<i64: 1, 1, 512>}, {transform_indices = @transform_3, window_bounds = array<i64: 128, 512>}]} {
    %c0_i32 = arith.constant 0 : i32
    %0 = arith.cmpi eq, %arg1, %c0_i32 : i32
    %1 = arith.extui %0 : i1 to i32
    %c0_i32_0 = arith.constant 0 : i32
    %2 = arith.cmpi ne, %1, %c0_i32_0 : i32
    scf.if %2 {
      %c0_13 = arith.constant 0 : index
      %c0_14 = arith.constant 0 : index
      %21 = vector.load %arg2[%c0_13, %c0_14] : memref<128x512xf32, #tpu.memory_space<vmem>>, vector<128x512xf32>
      %c0_15 = arith.constant 0 : index
      %c0_16 = arith.constant 0 : index
      %22 = vector.load %arg6[%c0_15, %c0_16] : memref<128x512xf32, #tpu.memory_space<vmem>>, vector<128x512xf32>
      tpu.vector_store %arg6[%c0_15, %c0_16], %21 {strides = array<i32>} : memref<128x512xf32, #tpu.memory_space<vmem>>, vector<128x512xf32>,
    } else {
    }
    %c0 = arith.constant 0 : index
    %c0_1 = arith.constant 0 : index
    %3 = vector.load %arg6[%c0, %c0_1] : memref<128x512xf32, #tpu.memory_space<vmem>>, vector<128x512xf32>
    %4 = arith.truncf %3 : vector<128x512xf32> to vector<128x512xbf16>
    %c0_2 = arith.constant 0 : index
    %c0_3 = arith.constant 0 : index
    %c0_4 = arith.constant 0 : index
    %5 = vector.load %arg3[%c0_2, %c0_3, %c0_4] : memref<1x512x512xbf16, #tpu.memory_space<vmem>>, vector<1x512x512xbf16>
    %6 = vector.shape_cast %5 : vector<1x512x512xbf16> to vector<512x512xbf16>
    %cst = arith.constant dense<0.000000e+00> : vector<128x512xf32>
    %7 = tpu.matmul %4, %6, %cst {dimension_numbers = #tpu.dot_dimension_numbers<[1], [0], [0], [1], [0, 0, 1, 1], [], []>} : vector<128x512xbf16>, vector<512x512xbf16>, vector<128x512xf32> -> vector<128x512xf32>
    %c0_5 = arith.constant 0 : index
    %c0_6 = arith.constant 0 : index
    %c0_7 = arith.constant 0 : index
    %8 = vector.load %arg4[%c0_5, %c0_6, %c0_7] : memref<1x1x512xf32, #tpu.memory_space<vmem>>, vector<1x1x512xf32>
    %9 = vector.shape_cast %8 : vector<1x1x512xf32> to vector<1x512xf32>
    %10 = vector.broadcast %9 : vector<1x512xf32> to vector<128x512xf32>
    %11 = arith.addf %7, %10 : vector<128x512xf32>
    %cst_8 = arith.constant 0.000000e+00 : f32
    %12 = vector.broadcast %cst_8 : f32 to vector<128x512xf32>
    %13 = arith.cmpf oge, %11, %12 : vector<128x512xf32>
    %cst_9 = arith.constant 0.00999999977 : f32
    %14 = vector.broadcast %cst_9 : f32 to vector<128x512xf32>
    %15 = arith.mulf %14, %11 : vector<128x512xf32>
    %16 = arith.select %13, %11, %15 : vector<128x512xi1>, vector<128x512xf32>
    %c0_10 = arith.constant 0 : index
    %c0_11 = arith.constant 0 : index
    %17 = vector.load %arg6[%c0_10, %c0_11] : memref<128x512xf32, #tpu.memory_space<vmem>>, vector<128x512xf32>
    tpu.vector_store %arg6[%c0_10, %c0_11], %16 {strides = array<i32>} : memref<128x512xf32, #tpu.memory_space<vmem>>, vector<128x512xf32>,
    %c7_i32 = arith.constant 7 : i32
    %18 = arith.cmpi eq, %arg1, %c7_i32 : i32
    %19 = arith.extui %18 : i1 to i32
    %c0_i32_12 = arith.constant 0 : i32
    %20 = arith.cmpi ne, %19, %c0_i32_12 : i32
    scf.if %20 {
      %c0_13 = arith.constant 0 : index
      %c0_14 = arith.constant 0 : index
      %21 = vector.load %arg6[%c0_13, %c0_14] : memref<128x512xf32, #tpu.memory_space<vmem>>, vector<128x512xf32>
      %c0_15 = arith.constant 0 : index
      %c0_16 = arith.constant 0 : index
      %22 = vector.load %arg5[%c0_15, %c0_16] : memref<128x512xf32, #tpu.memory_space<vmem>>, vector<128x512xf32>
      tpu.vector_store %arg5[%c0_15, %c0_16], %21 {strides = array<i32>} : memref<128x512xf32, #tpu.memory_space<vmem>>, vector<128x512xf32>,
    } else {
    }
    return
  }
  func.func @transform_0(%arg0: i32, %arg1: i32) -> (i32, i32) {
    %c0_i32 = arith.constant 0 : i32
    %c0_i32_0 = arith.constant 0 : i32
    return %arg0, %c0_i32 : i32, i32
  }
  func.func @transform_1(%arg0: i32, %arg1: i32) -> (i32, i32, i32) {
    %c0_i32 = arith.constant 0 : i32
    %c0_i32_0 = arith.constant 0 : i32
    %c0_i32_1 = arith.constant 0 : i32
    return %arg1, %c0_i32, %c0_i32_0 : i32, i32, i32
  }
  func.func @transform_2(%arg0: i32, %arg1: i32) -> (i32, i32, i32) {
    %c0_i32 = arith.constant 0 : i32
    %c0_i32_0 = arith.constant 0 : i32
    %c0_i32_1 = arith.constant 0 : i32
    return %arg1, %c0_i32, %c0_i32_0 : i32, i32, i32
  }
  func.func @transform_3(%arg0: i32, %arg1: i32) -> (i32, i32) {
    %c0_i32 = arith.constant 0 : i32
    %c0_i32_0 = arith.constant 0 : i32
    return %arg0, %c0_i32 : i32, i32
  }
}

</mosaic_0001>

<llo_original>
// kernel: tpu_custom_call.1
$region0: #{tpu_custom_call.1}
  #allocation0 [shape = 'u32[]', space=smem, size = 0x4, offset = 0x4, fixed_abs, tag = 'smem constant byte address 0x4 - core index']
  #allocation1 [shape = 'u32[144,128]{1,0:T(1,128)}', space=vmem, size = 0x12000, scoped, tag = 'internal scratch']
  #allocation2 [shape = 'f32[128,512]{1,0:T(8,128)}', space=vmem, size = 0x40000, scoped, tag = 'scratch operand']
  %s0 = inlined_call_operand.hbm [shape: f32[256,512], index: 0, kind: input, shape index: {}]
  %s1 = inlined_call_operand.hbm [shape: bf16[8,512,512], index: 1, kind: input, shape index: {}]
  %s2 = inlined_call_operand.hbm [shape: f32[8,1,512], index: 2, kind: input, shape index: {}]
  %s3 = inlined_call_operand.hbm [shape: f32[256,512], index: 3, kind: output, shape index: {}]
  %s4 = sld [smem:[#allocation0]]
  $region65: #{tpu_custom_call.1} parent=0
    _
  %s6 = ssub.s32 1, %s4
  %s7 = scalar_select 0, %s6, %s4
  $region1: #{tpu_custom_call.1} parent=0
    #allocation3 [shape = 'u8[524288]{0}', space=vmem, size = 0x80000, scoped, tag = 'input window, operand 0']
    #allocation4 [shape = 's32[2]{0}', space=sflag, size = 0x8, scoped, tag = 'scoped memory for tpu_custom_call.1']
    #allocation5 [shape = 's32[2]{0}', space=sflag, size = 0x8, scoped, tag = 'scoped memory for tpu_custom_call.1']
    #allocation6 [shape = 'u8[1048576]{0}', space=vmem, size = 0x100000, scoped, tag = 'input window, operand 1']
    #allocation7 [shape = 's32[2]{0}', space=sflag, size = 0x8, scoped, tag = 'scoped memory for tpu_custom_call.1']
    #allocation8 [shape = 'u8[4096]{0}', space=vmem, size = 0x1000, scoped, tag = 'input window, operand 2']
    #allocation9 [shape = 'u8[524288]{0}', space=vmem, size = 0x80000, scoped, tag = 'output window, operand 0']
    %8 = vsyncpa [#allocation4], 0
    %s9 = scalar_lea.sflag [#allocation4], 1
    %10 = vsyncpa %s9, 0
    %11 = vsyncpa [#allocation7], 0
    %s12 = scalar_lea.sflag [#allocation7], 1
    %13 = vsyncpa %s12, 0
    %14 = vsyncpa [#allocation5], 0
    %s15 = scalar_lea.sflag [#allocation5], 1
    %16 = vsyncpa %s15, 0
    loop: start=0, step=1, limit=18
    $region2: #{tpu_custom_call.1} parent=1 // loop_pre_header
      _
    $region3: #{tpu_custom_call.1} parent=1 // loop_header
      %s18 = sphi 0, %s22
      %p19 = scmp.ge.s32.totalorder %s18, 18
      %s25 = sphi 0, %s37
      %s26 = sphi 0, %s33
      %s27 = sphi 0, %s25
      %s28 = sphi 0, %s26
      %s29 = sphi 0, %s27
      %s30 = sphi 0, %s28
      %s40 = sphi 0, %s42
      %s43 = sphi 0, %s40
      %s44 = sphi 0, %s43
      %s60 = sphi 0, %s44
      %s66 = sphi 0, %s68
      %s69 = sphi 0, %s66
      %s70 = sphi 0, %s69
      %s86 = sphi 0, %s70
      %s92 = sphi 0, %s94
      %s95 = sphi 0, %s92
      %s96 = sphi 0, %s95
      %s112 = sphi 0, %s96
      %s118 = sphi 0, %s120
      %s121 = sphi 0, %s118
      %s122 = sphi 0, %s121
      %s138 = sphi 0, %s122
    $region4: #{tpu_custom_call.1} parent=1 // loop_header_branch
      %21 = sbr.rel (%p19) target = $region8
    $region5: #{tpu_custom_call.1} parent=1 // loop_body
      %s23 = ssub.s32 %s18, 1
      %s24 = ssub.s32 %s18, 2
      %s31 = sadd.s32 1, %s26
      %p32 = scmp.ge.s32.totalorder %s31, 8
      %s33 = scalar_select %p32, 0, %s31
      %s34 = sadd.s32 1, %s25
      %s35 = scalar_select %p32, %s34, %s25
      %p36 = scmp.ge.s32.totalorder %s35, 2
      %s37 = scalar_select %p36, 0, %s35
      %s38 = ssub.s32 %s25, %s37
      %p39 = scmp.eq.s32.totalorder %s38, 0
      %s41 = sadd.s32 %s40, 1
      %s42 = scalar_select %p39, %s40, %s41
      %p45 = pneg %p39
      %p46 = scmp.eq.s32.totalorder %s18, 15
      %p47 = por %p45, %p46
      %p48 = scmp.ne.s32.totalorder %s40, %s43
      %p49 = scmp.eq.s32.totalorder %s18, 0
      %p50 = por %p48, %p49
      %p51 = scmp.ne.s32.totalorder %s40, %s43
      %p52 = scmp.eq.s32.totalorder %s23, 15
      %p53 = por %p51, %p52
      %p54 = scmp.ne.s32.totalorder %s43, %s44
      %p55 = scmp.eq.s32.totalorder %s23, 0
      %p56 = por %p54, %p55
      %p57 = scmp.ne.s32.totalorder %s43, %s44
      %p58 = scmp.eq.s32.totalorder %s24, 15
      %p59 = por %p57, %p58
      %p61 = scmp.ne.s32.totalorder %s44, %s60
      %p62 = scmp.eq.s32.totalorder %s24, 0
      %p63 = por %p61, %p62
      %s64 = ssub.s32 %s26, %s33
      %p65 = scmp.eq.s32.totalorder %s64, 0
      %s67 = sadd.s32 %s66, 1
      %s68 = scalar_select %p65, %s66, %s67
      %p71 = pneg %p65
      %p72 = scmp.eq.s32.totalorder %s18, 15
      %p73 = por %p71, %p72
      %p74 = scmp.ne.s32.totalorder %s66, %s69
      %p75 = scmp.eq.s32.totalorder %s18, 0
      %p76 = por %p74, %p75
      %p77 = scmp.ne.s32.totalorder %s66, %s69
      %p78 = scmp.eq.s32.totalorder %s23, 15
      %p79 = por %p77, %p78
      %p80 = scmp.ne.s32.totalorder %s69, %s70
      %p81 = scmp.eq.s32.totalorder %s23, 0
      %p82 = por %p80, %p81
      %p83 = scmp.ne.s32.totalorder %s69, %s70
      %p84 = scmp.eq.s32.totalorder %s24, 15
      %p85 = por %p83, %p84
      %p87 = scmp.ne.s32.totalorder %s70, %s86
      %p88 = scmp.eq.s32.totalorder %s24, 0
      %p89 = por %p87, %p88
      %s90 = ssub.s32 %s26, %s33
      %p91 = scmp.eq.s32.totalorder %s90, 0
      %s93 = sadd.s32 %s92, 1
      %s94 = scalar_select %p91, %s92, %s93
      %p97 = pneg %p91
      %p98 = scmp.eq.s32.totalorder %s18, 15
      %p99 = por %p97, %p98
      %p100 = scmp.ne.s32.totalorder %s92, %s95
      %p101 = scmp.eq.s32.totalorder %s18, 0
      %p102 = por %p100, %p101
      %p103 = scmp.ne.s32.totalorder %s92, %s95
      %p104 = scmp.eq.s32.totalorder %s23, 15
      %p105 = por %p103, %p104
      %p106 = scmp.ne.s32.totalorder %s95, %s96
      %p107 = scmp.eq.s32.totalorder %s23, 0
      %p108 = por %p106, %p107
      %p109 = scmp.ne.s32.totalorder %s95, %s96
      %p110 = scmp.eq.s32.totalorder %s24, 15
      %p111 = por %p109, %p110
      %p113 = scmp.ne.s32.totalorder %s96, %s112
      %p114 = scmp.eq.s32.totalorder %s24, 0
      %p115 = por %p113, %p114
      %s116 = ssub.s32 %s25, %s37
      %p117 = scmp.eq.s32.totalorder %s116, 0
      %s119 = sadd.s32 %s118, 1
      %s120 = scalar_select %p117, %s118, %s119
      %p123 = pneg %p117
      %p124 = scmp.eq.s32.totalorder %s18, 15
      %p125 = por %p123, %p124
      %p126 = scmp.ne.s32.totalorder %s118, %s121
      %p127 = scmp.eq.s32.totalorder %s18, 0
      %p128 = por %p126, %p127
      %p129 = scmp.ne.s32.totalorder %s118, %s121
      %p130 = scmp.eq.s32.totalorder %s23, 15
      %p131 = por %p129, %p130
      %p132 = scmp.ne.s32.totalorder %s121, %s122
      %p133 = scmp.eq.s32.totalorder %s23, 0
      %p134 = por %p132, %p133
      %p135 = scmp.ne.s32.totalorder %s121, %s122
      %p136 = scmp.eq.s32.totalorder %s24, 15
      %p137 = por %p135, %p136
      %p139 = scmp.ne.s32.totalorder %s122, %s138
      %p140 = scmp.eq.s32.totalorder %s24, 0
      %p141 = por %p139, %p140
      %p142 = scmp.le.s32.totalorder 1, %s18
      %p143 = scmp.lt.s32.totalorder %s18, 17
      %p144 = pnand %p142, %p143
      %p145 = pneg %p144
      // Predicated region
      $region9: #{tpu_custom_call.1} parent=5 // pred_check
        _
      $region10: #{tpu_custom_call.1} parent=5 // pred_check_branch
        %147 = sbr.rel (%p144) target = $region12
      $region11: #{tpu_custom_call.1} parent=5 // pred_region
        %s148 = ssub.s32 %s18, 1
      $region12: #{tpu_custom_call.1} parent=5 // pred_fallthru
        _
      %p149 = scmp.lt.s32.totalorder %s18, 16
      // Predicated region
      $region13: #{tpu_custom_call.1} parent=5 // pred_check
        %p150 = pneg %p149
      $region14: #{tpu_custom_call.1} parent=5 // pred_check_branch
        %152 = sbr.rel (%p150) target = $region16
      $region15: #{tpu_custom_call.1} parent=5 // pred_region
        // Predicated region
        $region17: #{tpu_custom_call.1} parent=15 // pred_check
          %p153 = pneg %p50
        $region18: #{tpu_custom_call.1} parent=15 // pred_check_branch
          %155 = sbr.rel (%p153) target = $region20
        $region19: #{tpu_custom_call.1} parent=15 // pred_region
          %s156 = sand.u32 %s40, 1
          %s157 = scalar_lea.sflag [#allocation4], %s156
          %s158 = sand.u32 %s40, 1
          %s159 = smul.addr %s158, 512
          %s160 = scalar_lea.vmem [#allocation3], %s159
          %s161 = smul.u32 16, %s25
          %s163 = ssub.s32 8192, 8192
          %164 = vsyncadd %s157, %s163
          %s165 = smul.addr %s161, 4
          %s166 = smul.addr %s165, 128
          %s167 = scalar_lea.hbm %s0, %s166
          %s168 = sshll.u32 %s160, 4
          %s169 = int_to_ptr.vmem [resolvable:$true] %s168
          %174 = dma.hbm_to_vmem [thread:$0]  %s167, 8192, %s169, %s157, 512, 512, 32
        $region20: #{tpu_custom_call.1} parent=15 // pred_fallthru
          _
        // Predicated region
        $region21: #{tpu_custom_call.1} parent=15 // pred_check
          %p175 = pneg %p76
        $region22: #{tpu_custom_call.1} parent=15 // pred_check_branch
          %177 = sbr.rel (%p175) target = $region24
        $region23: #{tpu_custom_call.1} parent=15 // pred_region
          %s178 = sand.u32 %s18, 1
          %s179 = scalar_lea.sflag [#allocation7], %s178
          %s180 = sand.u32 %s66, 1
          %s181 = smul.addr %s180, 1024
          %s182 = scalar_lea.vmem [#allocation6], %s181
          %s184 = ssub.s32 16384, 16384
          %185 = vsyncadd %s179, %s184
          %s186 = smul.addr %s26, 256
          %s187 = smul.addr %s186, 64
          %s188 = scalar_lea.hbm %s1, %s187
          %s189 = sshll.u32 %s182, 4
          %s190 = int_to_ptr.vmem [resolvable:$true] %s189
          %195 = dma.hbm_to_vmem [thread:$0]  %s188, 16384, %s190, %s179, 256, 256, 16
        $region24: #{tpu_custom_call.1} parent=15 // pred_fallthru
          _
        // Predicated region
        $region25: #{tpu_custom_call.1} parent=15 // pred_check
          %p196 = pneg %p102
        $region26: #{tpu_custom_call.1} parent=15 // pred_check_branch
          %198 = sbr.rel (%p196) target = $region28
        $region27: #{tpu_custom_call.1} parent=15 // pred_region
          %s199 = sand.u32 %s18, 1
          %s200 = scalar_lea.sflag [#allocation7], %s199
          %s201 = sand.u32 %s92, 1
          %s202 = smul.addr %s201, 4
          %s203 = scalar_lea.vmem [#allocation8], %s202
          %s205 = ssub.s32 64, 64
          %206 = vsyncadd %s200, %s205
          %s207 = smul.addr %s26, 4
          %s208 = smul.addr %s207, 16
          %s209 = scalar_lea.hbm %s2, %s208
          %s211 = sshll.u32 %s203, 4
          %s212 = int_to_ptr.vmem [resolvable:$true] %s211
          %214 = dma.hbm_to_vmem [thread:$0]  %s209, 64, %s212, %s200
        $region28: #{tpu_custom_call.1} parent=15 // pred_fallthru
          _
      $region16: #{tpu_custom_call.1} parent=5 // pred_fallthru
        _
      %p215 = scmp.le.s32.totalorder 1, %s18
      %p216 = scmp.lt.s32.totalorder %s18, 17
      %p217 = pnand %p215, %p216
      %p218 = pneg %p217
      // Predicated region
      $region29: #{tpu_custom_call.1} parent=5 // pred_check
        _
      $region30: #{tpu_custom_call.1} parent=5 // pred_check_branch
        %220 = sbr.rel (%p217) target = $region32
      $region31: #{tpu_custom_call.1} parent=5 // pred_region
        %s221 = ssub.s32 %s18, 1
        %s222 = sand.u32 %s43, 1
        %s223 = scalar_lea.sflag [#allocation4], %s222
        %s224 = sand.u32 %s43, 1
        %s225 = smul.addr %s224, 512
        %s226 = scalar_lea.vmem [#allocation3], %s225
        // Predicated region
        $region33: #{tpu_custom_call.1} parent=31 // pred_check
          %p227 = pneg %p56
        $region34: #{tpu_custom_call.1} parent=31 // pred_check_branch
          %229 = sbr.rel (%p227) target = $region36
        $region35: #{tpu_custom_call.1} parent=31 // pred_region
          %230 = dma.done %s223, 8192
        $region36: #{tpu_custom_call.1} parent=31 // pred_fallthru
          _
        %s231 = sand.u32 %s23, 1
        %s232 = scalar_lea.sflag [#allocation7], %s231
        %s233 = sand.u32 %s69, 1
        %s234 = smul.addr %s233, 1024
        %s235 = scalar_lea.vmem [#allocation6], %s234
        // Predicated region
        $region37: #{tpu_custom_call.1} parent=31 // pred_check
          %p236 = pneg %p82
        $region38: #{tpu_custom_call.1} parent=31 // pred_check_branch
          %238 = sbr.rel (%p236) target = $region40
        $region39: #{tpu_custom_call.1} parent=31 // pred_region
          %239 = dma.done %s232, 16384
        $region40: #{tpu_custom_call.1} parent=31 // pred_fallthru
          _
        %s240 = sand.u32 %s23, 1
        %s241 = scalar_lea.sflag [#allocation7], %s240
        %s242 = sand.u32 %s95, 1
        %s243 = smul.addr %s242, 4
        %s244 = scalar_lea.vmem [#allocation8], %s243
        // Predicated region
        $region41: #{tpu_custom_call.1} parent=31 // pred_check
          %p245 = pneg %p108
        $region42: #{tpu_custom_call.1} parent=31 // pred_check_branch
          %247 = sbr.rel (%p245) target = $region44
        $region43: #{tpu_custom_call.1} parent=31 // pred_region
          %248 = dma.done %s241, 64
        $region44: #{tpu_custom_call.1} parent=31 // pred_fallthru
          _
        %s249 = sand.u32 %s43, 1
        %s250 = scalar_lea.sflag [#allocation4], %s249
        %s251 = sand.u32 %s43, 1
        %s252 = smul.addr %s251, 512
        %s253 = scalar_lea.vmem [#allocation3], %s252
        %p254 = pneg %p56
        %p255 = pneg %p53
        %s256 = sand.u32 %s23, 1
        %s257 = scalar_lea.sflag [#allocation7], %s256
        %s258 = sand.u32 %s69, 1
        %s259 = smul.addr %s258, 1024
        %s260 = scalar_lea.vmem [#allocation6], %s259
        %p261 = pneg %p82
        %p262 = pneg %p79
        %s263 = sand.u32 %s23, 1
        %s264 = scalar_lea.sflag [#allocation7], %s263
        %s265 = sand.u32 %s95, 1
        %s266 = smul.addr %s265, 4
        %s267 = scalar_lea.vmem [#allocation8], %s266
        %p268 = pneg %p108
        %p269 = pneg %p105
        %p270 = pneg %p134
        %p271 = pneg %p131
        %s272 = sand.u32 %s121, 1
        %s273 = scalar_lea.sflag [#allocation5], %s272
        %s274 = sand.u32 %s121, 1
        %s275 = smul.addr %s274, 512
        %s276 = scalar_lea.vmem [#allocation9], %s275
        %s277 = smul.u32 16, %s27
        %s278 = smul.u32 16, %s27
        %p279 = scmp.eq.s32.totalorder %s28, 0
        // Predicated region
        $region45: #{tpu_custom_call.1} parent=31 // pred_check
          %p280 = pneg %p279
        $region46: #{tpu_custom_call.1} parent=31 // pred_check_branch
          %282 = sbr.rel (%p280) target = $region48
        $region47: #{tpu_custom_call.1} parent=31 // pred_region
          %v283 = vld [vmem:[%s226] sm:$0xff]
          %v284 = vld [vmem:[%s226 + $0x8] sm:$0xff]
          %v285 = vld [vmem:[%s226 + $0x10] sm:$0xff]
          %v286 = vld [vmem:[%s226 + $0x18] sm:$0xff]
          %v287 = vld [vmem:[%s226 + $0x20] sm:$0xff]
          %v288 = vld [vmem:[%s226 + $0x28] sm:$0xff]
          %v289 = vld [vmem:[%s226 + $0x30] sm:$0xff]
          %v290 = vld [vmem:[%s226 + $0x38] sm:$0xff]
          %v291 = vld [vmem:[%s226 + $0x40] sm:$0xff]
          %v292 = vld [vmem:[%s226 + $0x48] sm:$0xff]
          %v293 = vld [vmem:[%s226 + $0x50] sm:$0xff]
          %v294 = vld [vmem:[%s226 + $0x58] sm:$0xff]
          %v295 = vld [vmem:[%s226 + $0x60] sm:$0xff]
          %v296 = vld [vmem:[%s226 + $0x68] sm:$0xff]
          %v297 = vld [vmem:[%s226 + $0x70] sm:$0xff]
          %v298 = vld [vmem:[%s226 + $0x78] sm:$0xff]
          %v299 = vld [vmem:[%s226 + $0x80] sm:$0xff]
          %v300 = vld [vmem:[%s226 + $0x88] sm:$0xff]
          %v301 = vld [vmem:[%s226 + $0x90] sm:$0xff]
          %v302 = vld [vmem:[%s226 + $0x98] sm:$0xff]
          %v303 = vld [vmem:[%s226 + $0xa0] sm:$0xff]
          %v304 = vld [vmem:[%s226 + $0xa8] sm:$0xff]
          %v305 = vld [vmem:[%s226 + $0xb0] sm:$0xff]
          %v306 = vld [vmem:[%s226 + $0xb8] sm:$0xff]
          %v307 = vld [vmem:[%s226 + $0xc0] sm:$0xff]
          %v308 = vld [vmem:[%s226 + $0xc8] sm:$0xff]
          %v309 = vld [vmem:[%s226 + $0xd0] sm:$0xff]
          %v310 = vld [vmem:[%s226 + $0xd8] sm:$0xff]
          %v311 = vld [vmem:[%s226 + $0xe0] sm:$0xff]
          %v312 = vld [vmem:[%s226 + $0xe8] sm:$0xff]
          %v313 = vld [vmem:[%s226 + $0xf0] sm:$0xff]
          %v314 = vld [vmem:[%s226 + $0xf8] sm:$0xff]
          %v315 = vld [vmem:[%s226 + $0x100] sm:$0xff]
          %v316 = vld [vmem:[%s226 + $0x108] sm:$0xff]
          %v317 = vld [vmem:[%s226 + $0x110] sm:$0xff]
          %v318 = vld [vmem:[%s226 + $0x118] sm:$0xff]
          %v319 = vld [vmem:[%s226 + $0x120] sm:$0xff]
          %v320 = vld [vmem:[%s226 + $0x128] sm:$0xff]
          %v321 = vld [vmem:[%s226 + $0x130] sm:$0xff]
          %v322 = vld [vmem:[%s226 + $0x138] sm:$0xff]
          %v323 = vld [vmem:[%s226 + $0x140] sm:$0xff]
          %v324 = vld [vmem:[%s226 + $0x148] sm:$0xff]
          %v325 = vld [vmem:[%s226 + $0x150] sm:$0xff]
          %v326 = vld [vmem:[%s226 + $0x158] sm:$0xff]
          %v327 = vld [vmem:[%s226 + $0x160] sm:$0xff]
          %v328 = vld [vmem:[%s226 + $0x168] sm:$0xff]
          %v329 = vld [vmem:[%s226 + $0x170] sm:$0xff]
          %v330 = vld [vmem:[%s226 + $0x178] sm:$0xff]
          %v331 = vld [vmem:[%s226 + $0x180] sm:$0xff]
          %v332 = vld [vmem:[%s226 + $0x188] sm:$0xff]
          %v333 = vld [vmem:[%s226 + $0x190] sm:$0xff]
          %v334 = vld [vmem:[%s226 + $0x198] sm:$0xff]
          %v335 = vld [vmem:[%s226 + $0x1a0] sm:$0xff]
          %v336 = vld [vmem:[%s226 + $0x1a8] sm:$0xff]
          %v337 = vld [vmem:[%s226 + $0x1b0] sm:$0xff]
          %v338 = vld [vmem:[%s226 + $0x1b8] sm:$0xff]
          %v339 = vld [vmem:[%s226 + $0x1c0] sm:$0xff]
          %v340 = vld [vmem:[%s226 + $0x1c8] sm:$0xff]
          %v341 = vld [vmem:[%s226 + $0x1d0] sm:$0xff]
          %v342 = vld [vmem:[%s226 + $0x1d8] sm:$0xff]
          %v343 = vld [vmem:[%s226 + $0x1e0] sm:$0xff]
          %v344 = vld [vmem:[%s226 + $0x1e8] sm:$0xff]
          %v345 = vld [vmem:[%s226 + $0x1f0] sm:$0xff]
          %v346 = vld [vmem:[%s226 + $0x1f8] sm:$0xff]
          %347 = vst [vmem:[#allocation2] sm:$0xff] %v283
          %348 = vst [vmem:[#allocation2 + $0x8] sm:$0xff] %v284
          %349 = vst [vmem:[#allocation2 + $0x10] sm:$0xff] %v285
          %350 = vst [vmem:[#allocation2 + $0x18] sm:$0xff] %v286
          %351 = vst [vmem:[#allocation2 + $0x20] sm:$0xff] %v287
          %352 = vst [vmem:[#allocation2 + $0x28] sm:$0xff] %v288
          %353 = vst [vmem:[#allocation2 + $0x30] sm:$0xff] %v289
          %354 = vst [vmem:[#allocation2 + $0x38] sm:$0xff] %v290
          %355 = vst [vmem:[#allocation2 + $0x40] sm:$0xff] %v291
          %356 = vst [vmem:[#allocation2 + $0x48] sm:$0xff] %v292
          %357 = vst [vmem:[#allocation2 + $0x50] sm:$0xff] %v293
          %358 = vst [vmem:[#allocation2 + $0x58] sm:$0xff] %v294
          %359 = vst [vmem:[#allocation2 + $0x60] sm:$0xff] %v295
          %360 = vst [vmem:[#allocation2 + $0x68] sm:$0xff] %v296
          %361 = vst [vmem:[#allocation2 + $0x70] sm:$0xff] %v297
          %362 = vst [vmem:[#allocation2 + $0x78] sm:$0xff] %v298
          %363 = vst [vmem:[#allocation2 + $0x80] sm:$0xff] %v299
          %364 = vst [vmem:[#allocation2 + $0x88] sm:$0xff] %v300
          %365 = vst [vmem:[#allocation2 + $0x90] sm:$0xff] %v301
          %366 = vst [vmem:[#allocation2 + $0x98] sm:$0xff] %v302
          %367 = vst [vmem:[#allocation2 + $0xa0] sm:$0xff] %v303
          %368 = vst [vmem:[#allocation2 + $0xa8] sm:$0xff] %v304
          %369 = vst [vmem:[#allocation2 + $0xb0] sm:$0xff] %v305
          %370 = vst [vmem:[#allocation2 + $0xb8] sm:$0xff] %v306
          %371 = vst [vmem:[#allocation2 + $0xc0] sm:$0xff] %v307
          %372 = vst [vmem:[#allocation2 + $0xc8] sm:$0xff] %v308
          %373 = vst [vmem:[#allocation2 + $0xd0] sm:$0xff] %v309
          %374 = vst [vmem:[#allocation2 + $0xd8] sm:$0xff] %v310
          %375 = vst [vmem:[#allocation2 + $0xe0] sm:$0xff] %v311
          %376 = vst [vmem:[#allocation2 + $0xe8] sm:$0xff] %v312
          %377 = vst [vmem:[#allocation2 + $0xf0] sm:$0xff] %v313
          %378 = vst [vmem:[#allocation2 + $0xf8] sm:$0xff] %v314
          %379 = vst [vmem:[#allocation2 + $0x100] sm:$0xff] %v315
          %380 = vst [vmem:[#allocation2 + $0x108] sm:$0xff] %v316
          %381 = vst [vmem:[#allocation2 + $0x110] sm:$0xff] %v317
          %382 = vst [vmem:[#allocation2 + $0x118] sm:$0xff] %v318
          %383 = vst [vmem:[#allocation2 + $0x120] sm:$0xff] %v319
          %384 = vst [vmem:[#allocation2 + $0x128] sm:$0xff] %v320
          %385 = vst [vmem:[#allocation2 + $0x130] sm:$0xff] %v321
          %386 = vst [vmem:[#allocation2 + $0x138] sm:$0xff] %v322
          %387 = vst [vmem:[#allocation2 + $0x140] sm:$0xff] %v323
          %388 = vst [vmem:[#allocation2 + $0x148] sm:$0xff] %v324
          %389 = vst [vmem:[#allocation2 + $0x150] sm:$0xff] %v325
          %390 = vst [vmem:[#allocation2 + $0x158] sm:$0xff] %v326
          %391 = vst [vmem:[#allocation2 + $0x160] sm:$0xff] %v327
          %392 = vst [vmem:[#allocation2 + $0x168] sm:$0xff] %v328
          %393 = vst [vmem:[#allocation2 + $0x170] sm:$0xff] %v329
          %394 = vst [vmem:[#allocation2 + $0x178] sm:$0xff] %v330
          %395 = vst [vmem:[#allocation2 + $0x180] sm:$0xff] %v331
          %396 = vst [vmem:[#allocation2 + $0x188] sm:$0xff] %v332
          %397 = vst [vmem:[#allocation2 + $0x190] sm:$0xff] %v333
          %398 = vst [vmem:[#allocation2 + $0x198] sm:$0xff] %v334
          %399 = vst [vmem:[#allocation2 + $0x1a0] sm:$0xff] %v335
          %400 = vst [vmem:[#allocation2 + $0x1a8] sm:$0xff] %v336
          %401 = vst [vmem:[#allocation2 + $0x1b0] sm:$0xff] %v337
          %402 = vst [vmem:[#allocation2 + $0x1b8] sm:$0xff] %v338
          %403 = vst [vmem:[#allocation2 + $0x1c0] sm:$0xff] %v339
          %404 = vst [vmem:[#allocation2 + $0x1c8] sm:$0xff] %v340
          %405 = vst [vmem:[#allocation2 + $0x1d0] sm:$0xff] %v341
          %406 = vst [vmem:[#allocation2 + $0x1d8] sm:$0xff] %v342
          %407 = vst [vmem:[#allocation2 + $0x1e0] sm:$0xff] %v343
          %408 = vst [vmem:[#allocation2 + $0x1e8] sm:$0xff] %v344
          %409 = vst [vmem:[#allocation2 + $0x1f0] sm:$0xff] %v345
          %410 = vst [vmem:[#allocation2 + $0x1f8] sm:$0xff] %v346
        $region48: #{tpu_custom_call.1} parent=31 // pred_fallthru
          _
        %v411 = vld [vmem:[#allocation2] sm:$0xff]
        %v412 = vld [vmem:[#allocation2 + $0x8] sm:$0xff]
        %v413 = vld [vmem:[#allocation2 + $0x10] sm:$0xff]
        %v414 = vld [vmem:[#allocation2 + $0x18] sm:$0xff]
        %v415 = vld [vmem:[#allocation2 + $0x20] sm:$0xff]
        %v416 = vld [vmem:[#allocation2 + $0x28] sm:$0xff]
        %v417 = vld [vmem:[#allocation2 + $0x30] sm:$0xff]
        %v418 = vld [vmem:[#allocation2 + $0x38] sm:$0xff]
        %v419 = vld [vmem:[#allocation2 + $0x40] sm:$0xff]
        %v420 = vld [vmem:[#allocation2 + $0x48] sm:$0xff]
        %v421 = vld [vmem:[#allocation2 + $0x50] sm:$0xff]
        %v422 = vld [vmem:[#allocation2 + $0x58] sm:$0xff]
        %v423 = vld [vmem:[#allocation2 + $0x60] sm:$0xff]
        %v424 = vld [vmem:[#allocation2 + $0x68] sm:$0xff]
        %v425 = vld [vmem:[#allocation2 + $0x70] sm:$0xff]
        %v426 = vld [vmem:[#allocation2 + $0x78] sm:$0xff]
        %v427 = vld [vmem:[#allocation2 + $0x80] sm:$0xff]
        %v428 = vld [vmem:[#allocation2 + $0x88] sm:$0xff]
        %v429 = vld [vmem:[#allocation2 + $0x90] sm:$0xff]
        %v430 = vld [vmem:[#allocation2 + $0x98] sm:$0xff]
        %v431 = vld [vmem:[#allocation2 + $0xa0] sm:$0xff]
        %v432 = vld [vmem:[#allocation2 + $0xa8] sm:$0xff]
        %v433 = vld [vmem:[#allocation2 + $0xb0] sm:$0xff]
        %v434 = vld [vmem:[#allocation2 + $0xb8] sm:$0xff]
        %v435 = vld [vmem:[#allocation2 + $0xc0] sm:$0xff]
        %v436 = vld [vmem:[#allocation2 + $0xc8] sm:$0xff]
        %v437 = vld [vmem:[#allocation2 + $0xd0] sm:$0xff]
        %v438 = vld [vmem:[#allocation2 + $0xd8] sm:$0xff]
        %v439 = vld [vmem:[#allocation2 + $0xe0] sm:$0xff]
        %v440 = vld [vmem:[#allocation2 + $0xe8] sm:$0xff]
        %v441 = vld [vmem:[#allocation2 + $0xf0] sm:$0xff]
        %v442 = vld [vmem:[#allocation2 + $0xf8] sm:$0xff]
        %v443 = vld [vmem:[#allocation2 + $0x100] sm:$0xff]
        %v444 = vld [vmem:[#allocation2 + $0x108] sm:$0xff]
        %v445 = vld [vmem:[#allocation2 + $0x110] sm:$0xff]
        %v446 = vld [vmem:[#allocation2 + $0x118] sm:$0xff]
        %v447 = vld [vmem:[#allocation2 + $0x120] sm:$0xff]
        %v448 = vld [vmem:[#allocation2 + $0x128] sm:$0xff]
        %v449 = vld [vmem:[#allocation2 + $0x130] sm:$0xff]
        %v450 = vld [vmem:[#allocation2 + $0x138] sm:$0xff]
        %v451 = vld [vmem:[#allocation2 + $0x140] sm:$0xff]
        %v452 = vld [vmem:[#allocation2 + $0x148] sm:$0xff]
        %v453 = vld [vmem:[#allocation2 + $0x150] sm:$0xff]
        %v454 = vld [vmem:[#allocation2 + $0x158] sm:$0xff]
        %v455 = vld [vmem:[#allocation2 + $0x160] sm:$0xff]
        %v456 = vld [vmem:[#allocation2 + $0x168] sm:$0xff]
        %v457 = vld [vmem:[#allocation2 + $0x170] sm:$0xff]
        %v458 = vld [vmem:[#allocation2 + $0x178] sm:$0xff]
        %v459 = vld [vmem:[#allocation2 + $0x180] sm:$0xff]
        %v460 = vld [vmem:[#allocation2 + $0x188] sm:$0xff]
        %v461 = vld [vmem:[#allocation2 + $0x190] sm:$0xff]
        %v462 = vld [vmem:[#allocation2 + $0x198] sm:$0xff]
        %v463 = vld [vmem:[#allocation2 + $0x1a0] sm:$0xff]
        %v464 = vld [vmem:[#allocation2 + $0x1a8] sm:$0xff]
        %v465 = vld [vmem:[#allocation2 + $0x1b0] sm:$0xff]
        %v466 = vld [vmem:[#allocation2 + $0x1b8] sm:$0xff]
        %v467 = vld [vmem:[#allocation2 + $0x1c0] sm:$0xff]
        %v468 = vld [vmem:[#allocation2 + $0x1c8] sm:$0xff]
        %v469 = vld [vmem:[#allocation2 + $0x1d0] sm:$0xff]
        %v470 = vld [vmem:[#allocation2 + $0x1d8] sm:$0xff]
        %v471 = vld [vmem:[#allocation2 + $0x1e0] sm:$0xff]
        %v472 = vld [vmem:[#allocation2 + $0x1e8] sm:$0xff]
        %v473 = vld [vmem:[#allocation2 + $0x1f0] sm:$0xff]
        %v474 = vld [vmem:[#allocation2 + $0x1f8] sm:$0xff]
        %v475 = vpack.c.bf16 %v415, %v411
        %v476 = vpack.c.bf16 %v416, %v412
        %v477 = vpack.c.bf16 %v417, %v413
        %v478 = vpack.c.bf16 %v418, %v414
        %v479 = vpack.c.bf16 %v423, %v419
        %v480 = vpack.c.bf16 %v424, %v420
        %v481 = vpack.c.bf16 %v425, %v421
        %v482 = vpack.c.bf16 %v426, %v422
        %v483 = vpack.c.bf16 %v431, %v427
        %v484 = vpack.c.bf16 %v432, %v428
        %v485 = vpack.c.bf16 %v433, %v429
        %v486 = vpack.c.bf16 %v434, %v430
        %v487 = vpack.c.bf16 %v439, %v435
        %v488 = vpack.c.bf16 %v440, %v436
        %v489 = vpack.c.bf16 %v441, %v437
        %v490 = vpack.c.bf16 %v442, %v438
        %v491 = vpack.c.bf16 %v447, %v443
        %v492 = vpack.c.bf16 %v448, %v444
        %v493 = vpack.c.bf16 %v449, %v445
        %v494 = vpack.c.bf16 %v450, %v446
        %v495 = vpack.c.bf16 %v455, %v451
        %v496 = vpack.c.bf16 %v456, %v452
        %v497 = vpack.c.bf16 %v457, %v453
        %v498 = vpack.c.bf16 %v458, %v454
        %v499 = vpack.c.bf16 %v463, %v459
        %v500 = vpack.c.bf16 %v464, %v460
        %v501 = vpack.c.bf16 %v465, %v461
        %v502 = vpack.c.bf16 %v466, %v462
        %v503 = vpack.c.bf16 %v471, %v467
        %v504 = vpack.c.bf16 %v472, %v468
        %v505 = vpack.c.bf16 %v473, %v469
        %v506 = vpack.c.bf16 %v474, %v470
        %v507 = vld [vmem:[%s235] sm:$0xff]
        %v508 = vld [vmem:[%s235 + $0x8] sm:$0xff]
        %v509 = vld [vmem:[%s235 + $0x10] sm:$0xff]
        %v510 = vld [vmem:[%s235 + $0x18] sm:$0xff]
        %v511 = vld [vmem:[%s235 + $0x20] sm:$0xff]
        %v512 = vld [vmem:[%s235 + $0x28] sm:$0xff]
        %v513 = vld [vmem:[%s235 + $0x30] sm:$0xff]
        %v514 = vld [vmem:[%s235 + $0x38] sm:$0xff]
        %v515 = vld [vmem:[%s235 + $0x40] sm:$0xff]
        %v516 = vld [vmem:[%s235 + $0x48] sm:$0xff]
        %v517 = vld [vmem:[%s235 + $0x50] sm:$0xff]
        %v518 = vld [vmem:[%s235 + $0x58] sm:$0xff]
        %v519 = vld [vmem:[%s235 + $0x60] sm:$0xff]
        %v520 = vld [vmem:[%s235 + $0x68] sm:$0xff]
        %v521 = vld [vmem:[%s235 + $0x70] sm:$0xff]
        %v522 = vld [vmem:[%s235 + $0x78] sm:$0xff]
        %v523 = vld [vmem:[%s235 + $0x80] sm:$0xff]
        %v524 = vld [vmem:[%s235 + $0x88] sm:$0xff]
        %v525 = vld [vmem:[%s235 + $0x90] sm:$0xff]
        %v526 = vld [vmem:[%s235 + $0x98] sm:$0xff]
        %v527 = vld [vmem:[%s235 + $0xa0] sm:$0xff]
        %v528 = vld [vmem:[%s235 + $0xa8] sm:$0xff]
        %v529 = vld [vmem:[%s235 + $0xb0] sm:$0xff]
        %v530 = vld [vmem:[%s235 + $0xb8] sm:$0xff]
        %v531 = vld [vmem:[%s235 + $0xc0] sm:$0xff]
        %v532 = vld [vmem:[%s235 + $0xc8] sm:$0xff]
        %v533 = vld [vmem:[%s235 + $0xd0] sm:$0xff]
        %v534 = vld [vmem:[%s235 + $0xd8] sm:$0xff]
        %v535 = vld [vmem:[%s235 + $0xe0] sm:$0xff]
        %v536 = vld [vmem:[%s235 + $0xe8] sm:$0xff]
        %v537 = vld [vmem:[%s235 + $0xf0] sm:$0xff]
        %v538 = vld [vmem:[%s235 + $0xf8] sm:$0xff]
        %v539 = vld [vmem:[%s235 + $0x100] sm:$0xff]
        %v540 = vld [vmem:[%s235 + $0x108] sm:$0xff]
        %v541 = vld [vmem:[%s235 + $0x110] sm:$0xff]
        %v542 = vld [vmem:[%s235 + $0x118] sm:$0xff]
        %v543 = vld [vmem:[%s235 + $0x120] sm:$0xff]
        %v544 = vld [vmem:[%s235 + $0x128] sm:$0xff]
        %v545 = vld [vmem:[%s235 + $0x130] sm:$0xff]
        %v546 = vld [vmem:[%s235 + $0x138] sm:$0xff]
        %v547 = vld [vmem:[%s235 + $0x140] sm:$0xff]
        %v548 = vld [vmem:[%s235 + $0x148] sm:$0xff]
        %v549 = vld [vmem:[%s235 + $0x150] sm:$0xff]
        %v550 = vld [vmem:[%s235 + $0x158] sm:$0xff]
        %v551 = vld [vmem:[%s235 + $0x160] sm:$0xff]
        %v552 = vld [vmem:[%s235 + $0x168] sm:$0xff]
        %v553 = vld [vmem:[%s235 + $0x170] sm:$0xff]
        %v554 = vld [vmem:[%s235 + $0x178] sm:$0xff]
        %v555 = vld [vmem:[%s235 + $0x180] sm:$0xff]
        %v556 = vld [vmem:[%s235 + $0x188] sm:$0xff]
        %v557 = vld [vmem:[%s235 + $0x190] sm:$0xff]
        %v558 = vld [vmem:[%s235 + $0x198] sm:$0xff]
        %v559 = vld [vmem:[%s235 + $0x1a0] sm:$0xff]
        %v560 = vld [vmem:[%s235 + $0x1a8] sm:$0xff]
        %v561 = vld [vmem:[%s235 + $0x1b0] sm:$0xff]
        %v562 = vld [vmem:[%s235 + $0x1b8] sm:$0xff]
        %v563 = vld [vmem:[%s235 + $0x1c0] sm:$0xff]
        %v564 = vld [vmem:[%s235 + $0x1c8] sm:$0xff]
        %v565 = vld [vmem:[%s235 + $0x1d0] sm:$0xff]
        %v566 = vld [vmem:[%s235 + $0x1d8] sm:$0xff]
        %v567 = vld [vmem:[%s235 + $0x1e0] sm:$0xff]
        %v568 = vld [vmem:[%s235 + $0x1e8] sm:$0xff]
        %v569 = vld [vmem:[%s235 + $0x1f0] sm:$0xff]
        %v570 = vld [vmem:[%s235 + $0x1f8] sm:$0xff]
        %v571 = vld [vmem:[%s235 + $0x200] sm:$0xff]
        %v572 = vld [vmem:[%s235 + $0x208] sm:$0xff]
        %v573 = vld [vmem:[%s235 + $0x210] sm:$0xff]
        %v574 = vld [vmem:[%s235 + $0x218] sm:$0xff]
        %v575 = vld [vmem:[%s235 + $0x220] sm:$0xff]
        %v576 = vld [vmem:[%s235 + $0x228] sm:$0xff]
        %v577 = vld [vmem:[%s235 + $0x230] sm:$0xff]
        %v578 = vld [vmem:[%s235 + $0x238] sm:$0xff]
        %v579 = vld [vmem:[%s235 + $0x240] sm:$0xff]
        %v580 = vld [vmem:[%s235 + $0x248] sm:$0xff]
        %v581 = vld [vmem:[%s235 + $0x250] sm:$0xff]
        %v582 = vld [vmem:[%s235 + $0x258] sm:$0xff]
        %v583 = vld [vmem:[%s235 + $0x260] sm:$0xff]
        %v584 = vld [vmem:[%s235 + $0x268] sm:$0xff]
        %v585 = vld [vmem:[%s235 + $0x270] sm:$0xff]
        %v586 = vld [vmem:[%s235 + $0x278] sm:$0xff]
        %v587 = vld [vmem:[%s235 + $0x280] sm:$0xff]
        %v588 = vld [vmem:[%s235 + $0x288] sm:$0xff]
        %v589 = vld [vmem:[%s235 + $0x290] sm:$0xff]
        %v590 = vld [vmem:[%s235 + $0x298] sm:$0xff]
        %v591 = vld [vmem:[%s235 + $0x2a0] sm:$0xff]
        %v592 = vld [vmem:[%s235 + $0x2a8] sm:$0xff]
        %v593 = vld [vmem:[%s235 + $0x2b0] sm:$0xff]
        %v594 = vld [vmem:[%s235 + $0x2b8] sm:$0xff]
        %v595 = vld [vmem:[%s235 + $0x2c0] sm:$0xff]
        %v596 = vld [vmem:[%s235 + $0x2c8] sm:$0xff]
        %v597 = vld [vmem:[%s235 + $0x2d0] sm:$0xff]
        %v598 = vld [vmem:[%s235 + $0x2d8] sm:$0xff]
        %v599 = vld [vmem:[%s235 + $0x2e0] sm:$0xff]
        %v600 = vld [vmem:[%s235 + $0x2e8] sm:$0xff]
        %v601 = vld [vmem:[%s235 + $0x2f0] sm:$0xff]
        %v602 = vld [vmem:[%s235 + $0x2f8] sm:$0xff]
        %v603 = vld [vmem:[%s235 + $0x300] sm:$0xff]
        %v604 = vld [vmem:[%s235 + $0x308] sm:$0xff]
        %v605 = vld [vmem:[%s235 + $0x310] sm:$0xff]
        %v606 = vld [vmem:[%s235 + $0x318] sm:$0xff]
        %v607 = vld [vmem:[%s235 + $0x320] sm:$0xff]
        %v608 = vld [vmem:[%s235 + $0x328] sm:$0xff]
        %v609 = vld [vmem:[%s235 + $0x330] sm:$0xff]
        %v610 = vld [vmem:[%s235 + $0x338] sm:$0xff]
        %v611 = vld [vmem:[%s235 + $0x340] sm:$0xff]
        %v612 = vld [vmem:[%s235 + $0x348] sm:$0xff]
        %v613 = vld [vmem:[%s235 + $0x350] sm:$0xff]
        %v614 = vld [vmem:[%s235 + $0x358] sm:$0xff]
        %v615 = vld [vmem:[%s235 + $0x360] sm:$0xff]
        %v616 = vld [vmem:[%s235 + $0x368] sm:$0xff]
        %v617 = vld [vmem:[%s235 + $0x370] sm:$0xff]
        %v618 = vld [vmem:[%s235 + $0x378] sm:$0xff]
        %v619 = vld [vmem:[%s235 + $0x380] sm:$0xff]
        %v620 = vld [vmem:[%s235 + $0x388] sm:$0xff]
        %v621 = vld [vmem:[%s235 + $0x390] sm:$0xff]
        %v622 = vld [vmem:[%s235 + $0x398] sm:$0xff]
        %v623 = vld [vmem:[%s235 + $0x3a0] sm:$0xff]
        %v624 = vld [vmem:[%s235 + $0x3a8] sm:$0xff]
        %v625 = vld [vmem:[%s235 + $0x3b0] sm:$0xff]
        %v626 = vld [vmem:[%s235 + $0x3b8] sm:$0xff]
        %v627 = vld [vmem:[%s235 + $0x3c0] sm:$0xff]
        %v628 = vld [vmem:[%s235 + $0x3c8] sm:$0xff]
        %v629 = vld [vmem:[%s235 + $0x3d0] sm:$0xff]
        %v630 = vld [vmem:[%s235 + $0x3d8] sm:$0xff]
        %v631 = vld [vmem:[%s235 + $0x3e0] sm:$0xff]
        %v632 = vld [vmem:[%s235 + $0x3e8] sm:$0xff]
        %v633 = vld [vmem:[%s235 + $0x3f0] sm:$0xff]
        %v634 = vld [vmem:[%s235 + $0x3f8] sm:$0xff]
        %v635 = vld [vmem:[%s244] sm:$0xf]
        %v637 = vlaneseq
        %v638 = vshrl.u32 %v637, 7
        %v639 = vsub.s32 0, %v638
        %v640 = vrot.slane %v635, %v639
        %v641 = vlaneseq
        %v642 = vshrl.u32 %v641, 7
        %v643 = vsub.s32 1, %v642
        %v644 = vrot.slane %v635, %v643
        %v645 = vlaneseq
        %v646 = vshrl.u32 %v645, 7
        %v647 = vsub.s32 2, %v646
        %v648 = vrot.slane %v635, %v647
        %v649 = vlaneseq
        %v650 = vshrl.u32 %v649, 7
        %v651 = vsub.s32 3, %v650
        %v652 = vrot.slane %v635, %v651
        %v785 = vunpack.c.l.b16 %v507
        %v786 = vunpack.c.h.b16 %v507
        %v787 = vunpack.c.l.b16 %v508
        %v788 = vunpack.c.h.b16 %v508
        %v789 = vunpack.c.l.b16 %v509
        %v790 = vunpack.c.h.b16 %v509
        %v791 = vunpack.c.l.b16 %v510
        %v792 = vunpack.c.h.b16 %v510
        %v793 = vunpack.c.l.b16 %v511
        %v794 = vunpack.c.h.b16 %v511
        %v795 = vunpack.c.l.b16 %v512
        %v796 = vunpack.c.h.b16 %v512
        %v797 = vunpack.c.l.b16 %v513
        %v798 = vunpack.c.h.b16 %v513
        %v799 = vunpack.c.l.b16 %v514
        %v800 = vunpack.c.h.b16 %v514
        %v801 = vunpack.c.l.b16 %v515
        %v802 = vunpack.c.h.b16 %v515
        %v803 = vunpack.c.l.b16 %v516
        %v804 = vunpack.c.h.b16 %v516
        %v805 = vunpack.c.l.b16 %v517
        %v806 = vunpack.c.h.b16 %v517
        %v807 = vunpack.c.l.b16 %v518
        %v808 = vunpack.c.h.b16 %v518
        %v809 = vunpack.c.l.b16 %v519
        %v810 = vunpack.c.h.b16 %v519
        %v811 = vunpack.c.l.b16 %v520
        %v812 = vunpack.c.h.b16 %v520
        %v813 = vunpack.c.l.b16 %v521
        %v814 = vunpack.c.h.b16 %v521
        %v815 = vunpack.c.l.b16 %v522
        %v816 = vunpack.c.h.b16 %v522
        %v817 = vunpack.c.l.b16 %v523
        %v818 = vunpack.c.h.b16 %v523
        %v819 = vunpack.c.l.b16 %v524
        %v820 = vunpack.c.h.b16 %v524
        %v821 = vunpack.c.l.b16 %v525
        %v822 = vunpack.c.h.b16 %v525
        %v823 = vunpack.c.l.b16 %v526
        %v824 = vunpack.c.h.b16 %v526
        %v825 = vunpack.c.l.b16 %v527
        %v826 = vunpack.c.h.b16 %v527
        %v827 = vunpack.c.l.b16 %v528
        %v828 = vunpack.c.h.b16 %v528
        %v829 = vunpack.c.l.b16 %v529
        %v830 = vunpack.c.h.b16 %v529
        %v831 = vunpack.c.l.b16 %v530
        %v832 = vunpack.c.h.b16 %v530
        %v833 = vunpack.c.l.b16 %v531
        %v834 = vunpack.c.h.b16 %v531
        %v835 = vunpack.c.l.b16 %v532
        %v836 = vunpack.c.h.b16 %v532
        %v837 = vunpack.c.l.b16 %v533
        %v838 = vunpack.c.h.b16 %v533
        %v839 = vunpack.c.l.b16 %v534
        %v840 = vunpack.c.h.b16 %v534
        %v841 = vunpack.c.l.b16 %v535
        %v842 = vunpack.c.h.b16 %v535
        %v843 = vunpack.c.l.b16 %v536
        %v844 = vunpack.c.h.b16 %v536
        %v845 = vunpack.c.l.b16 %v537
        %v846 = vunpack.c.h.b16 %v537
        %v847 = vunpack.c.l.b16 %v538
        %v848 = vunpack.c.h.b16 %v538
        %v849 = vunpack.c.l.b16 %v539
        %v850 = vunpack.c.h.b16 %v539
        %v851 = vunpack.c.l.b16 %v540
        %v852 = vunpack.c.h.b16 %v540
        %v853 = vunpack.c.l.b16 %v541
        %v854 = vunpack.c.h.b16 %v541
        %v855 = vunpack.c.l.b16 %v542
        %v856 = vunpack.c.h.b16 %v542
        %v857 = vunpack.c.l.b16 %v543
        %v858 = vunpack.c.h.b16 %v543
        %v859 = vunpack.c.l.b16 %v544
        %v860 = vunpack.c.h.b16 %v544
        %v861 = vunpack.c.l.b16 %v545
        %v862 = vunpack.c.h.b16 %v545
        %v863 = vunpack.c.l.b16 %v546
        %v864 = vunpack.c.h.b16 %v546
        %v865 = vunpack.c.l.b16 %v547
        %v866 = vunpack.c.h.b16 %v547
        %v867 = vunpack.c.l.b16 %v548
        %v868 = vunpack.c.h.b16 %v548
        %v869 = vunpack.c.l.b16 %v549
        %v870 = vunpack.c.h.b16 %v549
        %v871 = vunpack.c.l.b16 %v550
        %v872 = vunpack.c.h.b16 %v550
        %v873 = vunpack.c.l.b16 %v551
        %v874 = vunpack.c.h.b16 %v551
        %v875 = vunpack.c.l.b16 %v552
        %v876 = vunpack.c.h.b16 %v552
        %v877 = vunpack.c.l.b16 %v553
        %v878 = vunpack.c.h.b16 %v553
        %v879 = vunpack.c.l.b16 %v554
        %v880 = vunpack.c.h.b16 %v554
        %v881 = vunpack.c.l.b16 %v555
        %v882 = vunpack.c.h.b16 %v555
        %v883 = vunpack.c.l.b16 %v556
        %v884 = vunpack.c.h.b16 %v556
        %v885 = vunpack.c.l.b16 %v557
        %v886 = vunpack.c.h.b16 %v557
        %v887 = vunpack.c.l.b16 %v558
        %v888 = vunpack.c.h.b16 %v558
        %v889 = vunpack.c.l.b16 %v559
        %v890 = vunpack.c.h.b16 %v559
        %v891 = vunpack.c.l.b16 %v560
        %v892 = vunpack.c.h.b16 %v560
        %v893 = vunpack.c.l.b16 %v561
        %v894 = vunpack.c.h.b16 %v561
        %v895 = vunpack.c.l.b16 %v562
        %v896 = vunpack.c.h.b16 %v562
        %v897 = vunpack.c.l.b16 %v563
        %v898 = vunpack.c.h.b16 %v563
        %v899 = vunpack.c.l.b16 %v564
        %v900 = vunpack.c.h.b16 %v564
        %v901 = vunpack.c.l.b16 %v565
        %v902 = vunpack.c.h.b16 %v565
        %v903 = vunpack.c.l.b16 %v566
        %v904 = vunpack.c.h.b16 %v566
        %v905 = vunpack.c.l.b16 %v567
        %v906 = vunpack.c.h.b16 %v567
        %v907 = vunpack.c.l.b16 %v568
        %v908 = vunpack.c.h.b16 %v568
        %v909 = vunpack.c.l.b16 %v569
        %v910 = vunpack.c.h.b16 %v569
        %v911 = vunpack.c.l.b16 %v570
        %v912 = vunpack.c.h.b16 %v570
        %v913 = vunpack.c.l.b16 %v571
        %v914 = vunpack.c.h.b16 %v571
        %v915 = vunpack.c.l.b16 %v572
        %v916 = vunpack.c.h.b16 %v572
        %v917 = vunpack.c.l.b16 %v573
        %v918 = vunpack.c.h.b16 %v573
        %v919 = vunpack.c.l.b16 %v574
        %v920 = vunpack.c.h.b16 %v574
        %v921 = vunpack.c.l.b16 %v575
        %v922 = vunpack.c.h.b16 %v575
        %v923 = vunpack.c.l.b16 %v576
        %v924 = vunpack.c.h.b16 %v576
        %v925 = vunpack.c.l.b16 %v577
        %v926 = vunpack.c.h.b16 %v577
        %v927 = vunpack.c.l.b16 %v578
        %v928 = vunpack.c.h.b16 %v578
        %v929 = vunpack.c.l.b16 %v579
        %v930 = vunpack.c.h.b16 %v579
        %v931 = vunpack.c.l.b16 %v580
        %v932 = vunpack.c.h.b16 %v580
        %v933 = vunpack.c.l.b16 %v581
        %v934 = vunpack.c.h.b16 %v581
        %v935 = vunpack.c.l.b16 %v582
        %v936 = vunpack.c.h.b16 %v582
        %v937 = vunpack.c.l.b16 %v583
        %v938 = vunpack.c.h.b16 %v583
        %v939 = vunpack.c.l.b16 %v584
        %v940 = vunpack.c.h.b16 %v584
        %v941 = vunpack.c.l.b16 %v585
        %v942 = vunpack.c.h.b16 %v585
        %v943 = vunpack.c.l.b16 %v586
        %v944 = vunpack.c.h.b16 %v586
        %v945 = vunpack.c.l.b16 %v587
        %v946 = vunpack.c.h.b16 %v587
        %v947 = vunpack.c.l.b16 %v588
        %v948 = vunpack.c.h.b16 %v588
        %v949 = vunpack.c.l.b16 %v589
        %v950 = vunpack.c.h.b16 %v589
        %v951 = vunpack.c.l.b16 %v590
        %v952 = vunpack.c.h.b16 %v590
        %v953 = vunpack.c.l.b16 %v591
        %v954 = vunpack.c.h.b16 %v591
        %v955 = vunpack.c.l.b16 %v592
        %v956 = vunpack.c.h.b16 %v592
        %v957 = vunpack.c.l.b16 %v593
        %v958 = vunpack.c.h.b16 %v593
        %v959 = vunpack.c.l.b16 %v594
        %v960 = vunpack.c.h.b16 %v594
        %v961 = vunpack.c.l.b16 %v595
        %v962 = vunpack.c.h.b16 %v595
        %v963 = vunpack.c.l.b16 %v596
        %v964 = vunpack.c.h.b16 %v596
        %v965 = vunpack.c.l.b16 %v597
        %v966 = vunpack.c.h.b16 %v597
        %v967 = vunpack.c.l.b16 %v598
        %v968 = vunpack.c.h.b16 %v598
        %v969 = vunpack.c.l.b16 %v599
        %v970 = vunpack.c.h.b16 %v599
        %v971 = vunpack.c.l.b16 %v600
        %v972 = vunpack.c.h.b16 %v600
        %v973 = vunpack.c.l.b16 %v601
        %v974 = vunpack.c.h.b16 %v601
        %v975 = vunpack.c.l.b16 %v602
        %v976 = vunpack.c.h.b16 %v602
        %v977 = vunpack.c.l.b16 %v603
        %v978 = vunpack.c.h.b16 %v603
        %v979 = vunpack.c.l.b16 %v604
        %v980 = vunpack.c.h.b16 %v604
        %v981 = vunpack.c.l.b16 %v605
        %v982 = vunpack.c.h.b16 %v605
        %v983 = vunpack.c.l.b16 %v606
        %v984 = vunpack.c.h.b16 %v606
        %v985 = vunpack.c.l.b16 %v607
        %v986 = vunpack.c.h.b16 %v607
        %v987 = vunpack.c.l.b16 %v608
        %v988 = vunpack.c.h.b16 %v608
        %v989 = vunpack.c.l.b16 %v609
        %v990 = vunpack.c.h.b16 %v609
        %v991 = vunpack.c.l.b16 %v610
        %v992 = vunpack.c.h.b16 %v610
        %v993 = vunpack.c.l.b16 %v611
        %v994 = vunpack.c.h.b16 %v611
        %v995 = vunpack.c.l.b16 %v612
        %v996 = vunpack.c.h.b16 %v612
        %v997 = vunpack.c.l.b16 %v613
        %v998 = vunpack.c.h.b16 %v613
        %v999 = vunpack.c.l.b16 %v614
        %v1000 = vunpack.c.h.b16 %v614
        %v1001 = vunpack.c.l.b16 %v615
        %v1002 = vunpack.c.h.b16 %v615
        %v1003 = vunpack.c.l.b16 %v616
        %v1004 = vunpack.c.h.b16 %v616
        %v1005 = vunpack.c.l.b16 %v617
        %v1006 = vunpack.c.h.b16 %v617
        %v1007 = vunpack.c.l.b16 %v618
        %v1008 = vunpack.c.h.b16 %v618
        %v1009 = vunpack.c.l.b16 %v619
        %v1010 = vunpack.c.h.b16 %v619
        %v1011 = vunpack.c.l.b16 %v620
        %v1012 = vunpack.c.h.b16 %v620
        %v1013 = vunpack.c.l.b16 %v621
        %v1014 = vunpack.c.h.b16 %v621
        %v1015 = vunpack.c.l.b16 %v622
        %v1016 = vunpack.c.h.b16 %v622
        %v1017 = vunpack.c.l.b16 %v623
        %v1018 = vunpack.c.h.b16 %v623
        %v1019 = vunpack.c.l.b16 %v624
        %v1020 = vunpack.c.h.b16 %v624
        %v1021 = vunpack.c.l.b16 %v625
        %v1022 = vunpack.c.h.b16 %v625
        %v1023 = vunpack.c.l.b16 %v626
        %v1024 = vunpack.c.h.b16 %v626
        %v1025 = vunpack.c.l.b16 %v627
        %v1026 = vunpack.c.h.b16 %v627
        %v1027 = vunpack.c.l.b16 %v628
        %v1028 = vunpack.c.h.b16 %v628
        %v1029 = vunpack.c.l.b16 %v629
        %v1030 = vunpack.c.h.b16 %v629
        %v1031 = vunpack.c.l.b16 %v630
        %v1032 = vunpack.c.h.b16 %v630
        %v1033 = vunpack.c.l.b16 %v631
        %v1034 = vunpack.c.h.b16 %v631
        %v1035 = vunpack.c.l.b16 %v632
        %v1036 = vunpack.c.h.b16 %v632
        %v1037 = vunpack.c.l.b16 %v633
        %v1038 = vunpack.c.h.b16 %v633
        %v1039 = vunpack.c.l.b16 %v634
        %v1040 = vunpack.c.h.b16 %v634
        %v1041 = vpack.c.b16 %v789, %v785
        %v1042 = vpack.c.b16 %v790, %v786
        %v1043 = vpack.c.b16 %v791, %v787
        %v1044 = vpack.c.b16 %v792, %v788
        %v1045 = vpack.c.b16 %v797, %v793
        %v1046 = vpack.c.b16 %v798, %v794
        %v1047 = vpack.c.b16 %v799, %v795
        %v1048 = vpack.c.b16 %v800, %v796
        %v1049 = vpack.c.b16 %v805, %v801
        %v1050 = vpack.c.b16 %v806, %v802
        %v1051 = vpack.c.b16 %v807, %v803
        %v1052 = vpack.c.b16 %v808, %v804
        %v1053 = vpack.c.b16 %v813, %v809
        %v1054 = vpack.c.b16 %v814, %v810
        %v1055 = vpack.c.b16 %v815, %v811
        %v1056 = vpack.c.b16 %v816, %v812
        %v1057 = vpack.c.b16 %v821, %v817
        %v1058 = vpack.c.b16 %v822, %v818
        %v1059 = vpack.c.b16 %v823, %v819
        %v1060 = vpack.c.b16 %v824, %v820
        %v1061 = vpack.c.b16 %v829, %v825
        %v1062 = vpack.c.b16 %v830, %v826
        %v1063 = vpack.c.b16 %v831, %v827
        %v1064 = vpack.c.b16 %v832, %v828
        %v1065 = vpack.c.b16 %v837, %v833
        %v1066 = vpack.c.b16 %v838, %v834
        %v1067 = vpack.c.b16 %v839, %v835
        %v1068 = vpack.c.b16 %v840, %v836
        %v1069 = vpack.c.b16 %v845, %v841
        %v1070 = vpack.c.b16 %v846, %v842
        %v1071 = vpack.c.b16 %v847, %v843
        %v1072 = vpack.c.b16 %v848, %v844
        %v1073 = vpack.c.b16 %v853, %v849
        %v1074 = vpack.c.b16 %v854, %v850
        %v1075 = vpack.c.b16 %v855, %v851
        %v1076 = vpack.c.b16 %v856, %v852
        %v1077 = vpack.c.b16 %v861, %v857
        %v1078 = vpack.c.b16 %v862, %v858
        %v1079 = vpack.c.b16 %v863, %v859
        %v1080 = vpack.c.b16 %v864, %v860
        %v1081 = vpack.c.b16 %v869, %v865
        %v1082 = vpack.c.b16 %v870, %v866
        %v1083 = vpack.c.b16 %v871, %v867
        %v1084 = vpack.c.b16 %v872, %v868
        %v1085 = vpack.c.b16 %v877, %v873
        %v1086 = vpack.c.b16 %v878, %v874
        %v1087 = vpack.c.b16 %v879, %v875
        %v1088 = vpack.c.b16 %v880, %v876
        %v1089 = vpack.c.b16 %v885, %v881
        %v1090 = vpack.c.b16 %v886, %v882
        %v1091 = vpack.c.b16 %v887, %v883
        %v1092 = vpack.c.b16 %v888, %v884
        %v1093 = vpack.c.b16 %v893, %v889
        %v1094 = vpack.c.b16 %v894, %v890
        %v1095 = vpack.c.b16 %v895, %v891
        %v1096 = vpack.c.b16 %v896, %v892
        %v1097 = vpack.c.b16 %v901, %v897
        %v1098 = vpack.c.b16 %v902, %v898
        %v1099 = vpack.c.b16 %v903, %v899
        %v1100 = vpack.c.b16 %v904, %v900
        %v1101 = vpack.c.b16 %v909, %v905
        %v1102 = vpack.c.b16 %v910, %v906
        %v1103 = vpack.c.b16 %v911, %v907
        %v1104 = vpack.c.b16 %v912, %v908
        %v1105 = vpack.c.b16 %v917, %v913
        %v1106 = vpack.c.b16 %v918, %v914
        %v1107 = vpack.c.b16 %v919, %v915
        %v1108 = vpack.c.b16 %v920, %v916
        %v1109 = vpack.c.b16 %v925, %v921
        %v1110 = vpack.c.b16 %v926, %v922
        %v1111 = vpack.c.b16 %v927, %v923
        %v1112 = vpack.c.b16 %v928, %v924
        %v1113 = vpack.c.b16 %v933, %v929
        %v1114 = vpack.c.b16 %v934, %v930
        %v1115 = vpack.c.b16 %v935, %v931
        %v1116 = vpack.c.b16 %v936, %v932
        %v1117 = vpack.c.b16 %v941, %v937
        %v1118 = vpack.c.b16 %v942, %v938
        %v1119 = vpack.c.b16 %v943, %v939
        %v1120 = vpack.c.b16 %v944, %v940
        %v1121 = vpack.c.b16 %v949, %v945
        %v1122 = vpack.c.b16 %v950, %v946
        %v1123 = vpack.c.b16 %v951, %v947
        %v1124 = vpack.c.b16 %v952, %v948
        %v1125 = vpack.c.b16 %v957, %v953
        %v1126 = vpack.c.b16 %v958, %v954
        %v1127 = vpack.c.b16 %v959, %v955
        %v1128 = vpack.c.b16 %v960, %v956
        %v1129 = vpack.c.b16 %v965, %v961
        %v1130 = vpack.c.b16 %v966, %v962
        %v1131 = vpack.c.b16 %v967, %v963
        %v1132 = vpack.c.b16 %v968, %v964
        %v1133 = vpack.c.b16 %v973, %v969
        %v1134 = vpack.c.b16 %v974, %v970
        %v1135 = vpack.c.b16 %v975, %v971
        %v1136 = vpack.c.b16 %v976, %v972
        %v1137 = vpack.c.b16 %v981, %v977
        %v1138 = vpack.c.b16 %v982, %v978
        %v1139 = vpack.c.b16 %v983, %v979
        %v1140 = vpack.c.b16 %v984, %v980
        %v1141 = vpack.c.b16 %v989, %v985
        %v1142 = vpack.c.b16 %v990, %v986
        %v1143 = vpack.c.b16 %v991, %v987
        %v1144 = vpack.c.b16 %v992, %v988
        %v1145 = vpack.c.b16 %v997, %v993
        %v1146 = vpack.c.b16 %v998, %v994
        %v1147 = vpack.c.b16 %v999, %v995
        %v1148 = vpack.c.b16 %v1000, %v996
        %v1149 = vpack.c.b16 %v1005, %v1001
        %v1150 = vpack.c.b16 %v1006, %v1002
        %v1151 = vpack.c.b16 %v1007, %v1003
        %v1152 = vpack.c.b16 %v1008, %v1004
        %v1153 = vpack.c.b16 %v1013, %v1009
        %v1154 = vpack.c.b16 %v1014, %v1010
        %v1155 = vpack.c.b16 %v1015, %v1011
        %v1156 = vpack.c.b16 %v1016, %v1012
        %v1157 = vpack.c.b16 %v1021, %v1017
        %v1158 = vpack.c.b16 %v1022, %v1018
        %v1159 = vpack.c.b16 %v1023, %v1019
        %v1160 = vpack.c.b16 %v1024, %v1020
        %v1161 = vpack.c.b16 %v1029, %v1025
        %v1162 = vpack.c.b16 %v1030, %v1026
        %v1163 = vpack.c.b16 %v1031, %v1027
        %v1164 = vpack.c.b16 %v1032, %v1028
        %v1165 = vpack.c.b16 %v1037, %v1033
        %v1166 = vpack.c.b16 %v1038, %v1034
        %v1167 = vpack.c.b16 %v1039, %v1035
        %v1168 = vpack.c.b16 %v1040, %v1036
        %1297 = vmatprep.subr.bf16.mxu0 %v1042
        %1298 = vmatpush1.bf16.msra.mxu0 %v1041
        %1299 = vmatprep.subr.bf16.mxu0 %v1046
        %1300 = vmatpush1.bf16.msra.mxu0 %v1045
        %1301 = vmatprep.subr.bf16.mxu0 %v1050
        %1302 = vmatpush1.bf16.msra.mxu0 %v1049
        %1303 = vmatprep.subr.bf16.mxu0 %v1054
        %1304 = vmatpush1.bf16.msra.mxu0 %v1053
        %1305 = vmatprep.subr.bf16.mxu0 %v1058
        %1306 = vmatpush1.bf16.msra.mxu0 %v1057
        %1307 = vmatprep.subr.bf16.mxu0 %v1062
        %1308 = vmatpush1.bf16.msra.mxu0 %v1061
        %1309 = vmatprep.subr.bf16.mxu0 %v1066
        %1310 = vmatpush1.bf16.msra.mxu0 %v1065
        %1311 = vmatprep.subr.bf16.mxu0 %v1070
        %1312 = vmatpush1.bf16.msra.mxu0 %v1069
        %1313 = vmatprep.subr.bf16.mxu0 %v1074
        %1314 = vmatpush1.bf16.msra.mxu0 %v1073
        %1315 = vmatprep.subr.bf16.mxu0 %v1078
        %1316 = vmatpush1.bf16.msra.mxu0 %v1077
        %1317 = vmatprep.subr.bf16.mxu0 %v1082
        %1318 = vmatpush1.bf16.msra.mxu0 %v1081
        %1319 = vmatprep.subr.bf16.mxu0 %v1086
        %1320 = vmatpush1.bf16.msra.mxu0 %v1085
        %1321 = vmatprep.subr.bf16.mxu0 %v1090
        %1322 = vmatpush1.bf16.msra.mxu0 %v1089
        %1323 = vmatprep.subr.bf16.mxu0 %v1094
        %1324 = vmatpush1.bf16.msra.mxu0 %v1093
        %1325 = vmatprep.subr.bf16.mxu0 %v1098
        %1326 = vmatpush1.bf16.msra.mxu0 %v1097
        %1327 = vmatprep.subr.bf16.mxu0 %v1102
        %1328 = vmatpush1.bf16.msra.mxu0 %v1101
        %1329 = vmatprep.mubr.bf16.mxu0 %v476
        %1330 = vmatmul.mubr.bf16.gmra.mrb[0].mxu0 %v475
        %v1331 = vpop.f32.mrb[0].mxu0
        %v1332 = vadd.f32 %v640, %v1331
        %v1333 = vpop.f32.mrb[0].mxu0
        %v1334 = vadd.f32 %v644, %v1333
        %v1335 = vpop.f32.mrb[0].mxu0
        %v1336 = vadd.f32 %v640, %v1335
        %v1337 = vpop.f32.mrb[0].mxu0
        %v1338 = vadd.f32 %v644, %v1337
        %1339 = vmatprep.mubr.bf16.mxu0 %v480
        %1340 = vmatmul.mubr.bf16.gmra.mrb[0].mxu0 %v479
        %v1341 = vpop.f32.mrb[0].mxu0
        %v1342 = vadd.f32 %v640, %v1341
        %v1343 = vpop.f32.mrb[0].mxu0
        %v1344 = vadd.f32 %v644, %v1343
        %v1345 = vpop.f32.mrb[0].mxu0
        %v1346 = vadd.f32 %v640, %v1345
        %v1347 = vpop.f32.mrb[0].mxu0
        %v1348 = vadd.f32 %v644, %v1347
        %1349 = vmatprep.mubr.bf16.mxu0 %v484
        %1350 = vmatmul.mubr.bf16.gmra.mrb[0].mxu0 %v483
        %v1351 = vpop.f32.mrb[0].mxu0
        %v1352 = vadd.f32 %v640, %v1351
        %v1353 = vpop.f32.mrb[0].mxu0
        %v1354 = vadd.f32 %v644, %v1353
        %v1355 = vpop.f32.mrb[0].mxu0
        %v1356 = vadd.f32 %v640, %v1355
        %v1357 = vpop.f32.mrb[0].mxu0
        %v1358 = vadd.f32 %v644, %v1357
        %1359 = vmatprep.mubr.bf16.mxu0 %v488
        %1360 = vmatmul.mubr.bf16.gmra.mrb[0].mxu0 %v487
        %v1361 = vpop.f32.mrb[0].mxu0
        %v1362 = vadd.f32 %v640, %v1361
        %v1363 = vpop.f32.mrb[0].mxu0
        %v1364 = vadd.f32 %v644, %v1363
        %v1365 = vpop.f32.mrb[0].mxu0
        %v1366 = vadd.f32 %v640, %v1365
        %v1367 = vpop.f32.mrb[0].mxu0
        %v1368 = vadd.f32 %v644, %v1367
        %1369 = vmatprep.mubr.bf16.mxu0 %v492
        %1370 = vmatmul.mubr.bf16.gmra.mrb[0].mxu0 %v491
        %v1371 = vpop.f32.mrb[0].mxu0
        %v1372 = vadd.f32 %v640, %v1371
        %v1373 = vpop.f32.mrb[0].mxu0
        %v1374 = vadd.f32 %v644, %v1373
        %v1375 = vpop.f32.mrb[0].mxu0
        %v1376 = vadd.f32 %v640, %v1375
        %v1377 = vpop.f32.mrb[0].mxu0
        %v1378 = vadd.f32 %v644, %v1377
        %1379 = vmatprep.mubr.bf16.mxu0 %v496
        %1380 = vmatmul.mubr.bf16.gmra.mrb[0].mxu0 %v495
        %v1381 = vpop.f32.mrb[0].mxu0
        %v1382 = vadd.f32 %v640, %v1381
        %v1383 = vpop.f32.mrb[0].mxu0
        %v1384 = vadd.f32 %v644, %v1383
        %v1385 = vpop.f32.mrb[0].mxu0
        %v1386 = vadd.f32 %v640, %v1385
        %v1387 = vpop.f32.mrb[0].mxu0
        %v1388 = vadd.f32 %v644, %v1387
        %1389 = vmatprep.mubr.bf16.mxu0 %v500
        %1390 = vmatmul.mubr.bf16.gmra.mrb[0].mxu0 %v499
        %v1391 = vpop.f32.mrb[0].mxu0
        %v1392 = vadd.f32 %v640, %v1391
        %v1393 = vpop.f32.mrb[0].mxu0
        %v1394 = vadd.f32 %v644, %v1393
        %v1395 = vpop.f32.mrb[0].mxu0
        %v1396 = vadd.f32 %v640, %v1395
        %v1397 = vpop.f32.mrb[0].mxu0
        %v1398 = vadd.f32 %v644, %v1397
        %1399 = vmatprep.mubr.bf16.mxu0 %v504
        %1400 = vmatmul.mubr.bf16.gmra.mrb[0].mxu0 %v503
        %v1401 = vpop.f32.mrb[0].mxu0
        %v1402 = vadd.f32 %v640, %v1401
        %v1403 = vpop.f32.mrb[0].mxu0
        %v1404 = vadd.f32 %v644, %v1403
        %v1405 = vpop.f32.mrb[0].mxu0
        %v1406 = vadd.f32 %v640, %v1405
        %v1407 = vpop.f32.mrb[0].mxu0
        %v1408 = vadd.f32 %v644, %v1407
        %1409 = vdwg.mxu0
        %1410 = vmatprep.subr.bf16.mxu0 %v1106
        %1411 = vmatpush1.bf16.msra.mxu0 %v1105
        %1412 = vmatprep.subr.bf16.mxu0 %v1110
        %1413 = vmatpush1.bf16.msra.mxu0 %v1109
        %1414 = vmatprep.subr.bf16.mxu0 %v1114
        %1415 = vmatpush1.bf16.msra.mxu0 %v1113
        %1416 = vmatprep.subr.bf16.mxu0 %v1118
        %1417 = vmatpush1.bf16.msra.mxu0 %v1117
        %1418 = vmatprep.subr.bf16.mxu0 %v1122
        %1419 = vmatpush1.bf16.msra.mxu0 %v1121
        %1420 = vmatprep.subr.bf16.mxu0 %v1126
        %1421 = vmatpush1.bf16.msra.mxu0 %v1125
        %1422 = vmatprep.subr.bf16.mxu0 %v1130
        %1423 = vmatpush1.bf16.msra.mxu0 %v1129
        %1424 = vmatprep.subr.bf16.mxu0 %v1134
        %1425 = vmatpush1.bf16.msra.mxu0 %v1133
        %1426 = vmatprep.subr.bf16.mxu0 %v1138
        %1427 = vmatpush1.bf16.msra.mxu0 %v1137
        %1428 = vmatprep.subr.bf16.mxu0 %v1142
        %1429 = vmatpush1.bf16.msra.mxu0 %v1141
        %1430 = vmatprep.subr.bf16.mxu0 %v1146
        %1431 = vmatpush1.bf16.msra.mxu0 %v1145
        %1432 = vmatprep.subr.bf16.mxu0 %v1150
        %1433 = vmatpush1.bf16.msra.mxu0 %v1149
        %1434 = vmatprep.subr.bf16.mxu0 %v1154
        %1435 = vmatpush1.bf16.msra.mxu0 %v1153
        %1436 = vmatprep.subr.bf16.mxu0 %v1158
        %1437 = vmatpush1.bf16.msra.mxu0 %v1157
        %1438 = vmatprep.subr.bf16.mxu0 %v1162
        %1439 = vmatpush1.bf16.msra.mxu0 %v1161
        %1440 = vmatprep.subr.bf16.mxu0 %v1166
        %1441 = vmatpush1.bf16.msra.mxu0 %v1165
        %1442 = vmatprep.mubr.bf16.mxu0 %v478
        %1443 = vmatmul.mubr.bf16.gmra.mrb[0].mxu0 %v477
        %v1444 = vpop.f32.mrb[0].mxu0
        %v1445 = vadd.f32 %v1332, %v1444
        %v1446 = vpop.f32.mrb[0].mxu0
        %v1447 = vadd.f32 %v1334, %v1446
        %v1448 = vpop.f32.mrb[0].mxu0
        %v1449 = vadd.f32 %v1336, %v1448
        %v1450 = vpop.f32.mrb[0].mxu0
        %v1451 = vadd.f32 %v1338, %v1450
        %1452 = vmatprep.mubr.bf16.mxu0 %v482
        %1453 = vmatmul.mubr.bf16.gmra.mrb[0].mxu0 %v481
        %v1454 = vpop.f32.mrb[0].mxu0
        %v1455 = vadd.f32 %v1342, %v1454
        %v1456 = vpop.f32.mrb[0].mxu0
        %v1457 = vadd.f32 %v1344, %v1456
        %v1458 = vpop.f32.mrb[0].mxu0
        %v1459 = vadd.f32 %v1346, %v1458
        %v1460 = vpop.f32.mrb[0].mxu0
        %v1461 = vadd.f32 %v1348, %v1460
        %1462 = vmatprep.mubr.bf16.mxu0 %v486
        %1463 = vmatmul.mubr.bf16.gmra.mrb[0].mxu0 %v485
        %v1464 = vpop.f32.mrb[0].mxu0
        %v1465 = vadd.f32 %v1352, %v1464
        %v1466 = vpop.f32.mrb[0].mxu0
        %v1467 = vadd.f32 %v1354, %v1466
        %v1468 = vpop.f32.mrb[0].mxu0
        %v1469 = vadd.f32 %v1356, %v1468
        %v1470 = vpop.f32.mrb[0].mxu0
        %v1471 = vadd.f32 %v1358, %v1470
        %1472 = vmatprep.mubr.bf16.mxu0 %v490
        %1473 = vmatmul.mubr.bf16.gmra.mrb[0].mxu0 %v489
        %v1474 = vpop.f32.mrb[0].mxu0
        %v1475 = vadd.f32 %v1362, %v1474
        %v1476 = vpop.f32.mrb[0].mxu0
        %v1477 = vadd.f32 %v1364, %v1476
        %v1478 = vpop.f32.mrb[0].mxu0
        %v1479 = vadd.f32 %v1366, %v1478
        %v1480 = vpop.f32.mrb[0].mxu0
        %v1481 = vadd.f32 %v1368, %v1480
        %1482 = vmatprep.mubr.bf16.mxu0 %v494
        %1483 = vmatmul.mubr.bf16.gmra.mrb[0].mxu0 %v493
        %v1484 = vpop.f32.mrb[0].mxu0
        %v1485 = vadd.f32 %v1372, %v1484
        %v1486 = vpop.f32.mrb[0].mxu0
        %v1487 = vadd.f32 %v1374, %v1486
        %v1488 = vpop.f32.mrb[0].mxu0
        %v1489 = vadd.f32 %v1376, %v1488
        %v1490 = vpop.f32.mrb[0].mxu0
        %v1491 = vadd.f32 %v1378, %v1490
        %1492 = vmatprep.mubr.bf16.mxu0 %v498
        %1493 = vmatmul.mubr.bf16.gmra.mrb[0].mxu0 %v497
        %v1494 = vpop.f32.mrb[0].mxu0
        %v1495 = vadd.f32 %v1382, %v1494
        %v1496 = vpop.f32.mrb[0].mxu0
        %v1497 = vadd.f32 %v1384, %v1496
        %v1498 = vpop.f32.mrb[0].mxu0
        %v1499 = vadd.f32 %v1386, %v1498
        %v1500 = vpop.f32.mrb[0].mxu0
        %v1501 = vadd.f32 %v1388, %v1500
        %1502 = vmatprep.mubr.bf16.mxu0 %v502
        %1503 = vmatmul.mubr.bf16.gmra.mrb[0].mxu0 %v501
        %v1504 = vpop.f32.mrb[0].mxu0
        %v1505 = vadd.f32 %v1392, %v1504
        %v1506 = vpop.f32.mrb[0].mxu0
        %v1507 = vadd.f32 %v1394, %v1506
        %v1508 = vpop.f32.mrb[0].mxu0
        %v1509 = vadd.f32 %v1396, %v1508
        %v1510 = vpop.f32.mrb[0].mxu0
        %v1511 = vadd.f32 %v1398, %v1510
        %1512 = vmatprep.mubr.bf16.mxu0 %v506
        %1513 = vmatmul.mubr.bf16.gmra.mrb[0].mxu0 %v505
        %v1514 = vpop.f32.mrb[0].mxu0
        %v1515 = vadd.f32 %v1402, %v1514
        %v1516 = vpop.f32.mrb[0].mxu0
        %v1517 = vadd.f32 %v1404, %v1516
        %v1518 = vpop.f32.mrb[0].mxu0
        %v1519 = vadd.f32 %v1406, %v1518
        %v1520 = vpop.f32.mrb[0].mxu0
        %v1521 = vadd.f32 %v1408, %v1520
        %1522 = vdwg.mxu0
        %1523 = vmatprep.subr.bf16.mxu0 %v1044
        %1524 = vmatpush1.bf16.msra.mxu0 %v1043
        %1525 = vmatprep.subr.bf16.mxu0 %v1048
        %1526 = vmatpush1.bf16.msra.mxu0 %v1047
        %1527 = vmatprep.subr.bf16.mxu0 %v1052
        %1528 = vmatpush1.bf16.msra.mxu0 %v1051
        %1529 = vmatprep.subr.bf16.mxu0 %v1056
        %1530 = vmatpush1.bf16.msra.mxu0 %v1055
        %1531 = vmatprep.subr.bf16.mxu0 %v1060
        %1532 = vmatpush1.bf16.msra.mxu0 %v1059
        %1533 = vmatprep.subr.bf16.mxu0 %v1064
        %1534 = vmatpush1.bf16.msra.mxu0 %v1063
        %1535 = vmatprep.subr.bf16.mxu0 %v1068
        %1536 = vmatpush1.bf16.msra.mxu0 %v1067
        %1537 = vmatprep.subr.bf16.mxu0 %v1072
        %1538 = vmatpush1.bf16.msra.mxu0 %v1071
        %1539 = vmatprep.subr.bf16.mxu0 %v1076
        %1540 = vmatpush1.bf16.msra.mxu0 %v1075
        %1541 = vmatprep.subr.bf16.mxu0 %v1080
        %1542 = vmatpush1.bf16.msra.mxu0 %v1079
        %1543 = vmatprep.subr.bf16.mxu0 %v1084
        %1544 = vmatpush1.bf16.msra.mxu0 %v1083
        %1545 = vmatprep.subr.bf16.mxu0 %v1088
        %1546 = vmatpush1.bf16.msra.mxu0 %v1087
        %1547 = vmatprep.subr.bf16.mxu0 %v1092
        %1548 = vmatpush1.bf16.msra.mxu0 %v1091
        %1549 = vmatprep.subr.bf16.mxu0 %v1096
        %1550 = vmatpush1.bf16.msra.mxu0 %v1095
        %1551 = vmatprep.subr.bf16.mxu0 %v1100
        %1552 = vmatpush1.bf16.msra.mxu0 %v1099
        %1553 = vmatprep.subr.bf16.mxu0 %v1104
        %1554 = vmatpush1.bf16.msra.mxu0 %v1103
        %1555 = vmatprep.mubr.bf16.mxu0 %v476
        %1556 = vmatmul.mubr.bf16.gmra.mrb[0].mxu0 %v475
        %v1557 = vpop.f32.mrb[0].mxu0
        %v1558 = vadd.f32 %v648, %v1557
        %v1559 = vpop.f32.mrb[0].mxu0
        %v1560 = vadd.f32 %v652, %v1559
        %v1561 = vpop.f32.mrb[0].mxu0
        %v1562 = vadd.f32 %v648, %v1561
        %v1563 = vpop.f32.mrb[0].mxu0
        %v1564 = vadd.f32 %v652, %v1563
        %1565 = vmatprep.mubr.bf16.mxu0 %v480
        %1566 = vmatmul.mubr.bf16.gmra.mrb[0].mxu0 %v479
        %v1567 = vpop.f32.mrb[0].mxu0
        %v1568 = vadd.f32 %v648, %v1567
        %v1569 = vpop.f32.mrb[0].mxu0
        %v1570 = vadd.f32 %v652, %v1569
        %v1571 = vpop.f32.mrb[0].mxu0
        %v1572 = vadd.f32 %v648, %v1571
        %v1573 = vpop.f32.mrb[0].mxu0
        %v1574 = vadd.f32 %v652, %v1573
        %1575 = vmatprep.mubr.bf16.mxu0 %v484
        %1576 = vmatmul.mubr.bf16.gmra.mrb[0].mxu0 %v483
        %v1577 = vpop.f32.mrb[0].mxu0
        %v1578 = vadd.f32 %v648, %v1577
        %v1579 = vpop.f32.mrb[0].mxu0
        %v1580 = vadd.f32 %v652, %v1579
        %v1581 = vpop.f32.mrb[0].mxu0
        %v1582 = vadd.f32 %v648, %v1581
        %v1583 = vpop.f32.mrb[0].mxu0
        %v1584 = vadd.f32 %v652, %v1583
        %1585 = vmatprep.mubr.bf16.mxu0 %v488
        %1586 = vmatmul.mubr.bf16.gmra.mrb[0].mxu0 %v487
        %v1587 = vpop.f32.mrb[0].mxu0
        %v1588 = vadd.f32 %v648, %v1587
        %v1589 = vpop.f32.mrb[0].mxu0
        %v1590 = vadd.f32 %v652, %v1589
        %v1591 = vpop.f32.mrb[0].mxu0
        %v1592 = vadd.f32 %v648, %v1591
        %v1593 = vpop.f32.mrb[0].mxu0
        %v1594 = vadd.f32 %v652, %v1593
        %1595 = vmatprep.mubr.bf16.mxu0 %v492
        %1596 = vmatmul.mubr.bf16.gmra.mrb[0].mxu0 %v491
        %v1597 = vpop.f32.mrb[0].mxu0
        %v1598 = vadd.f32 %v648, %v1597
        %v1599 = vpop.f32.mrb[0].mxu0
        %v1600 = vadd.f32 %v652, %v1599
        %v1601 = vpop.f32.mrb[0].mxu0
        %v1602 = vadd.f32 %v648, %v1601
        %v1603 = vpop.f32.mrb[0].mxu0
        %v1604 = vadd.f32 %v652, %v1603
        %1605 = vmatprep.mubr.bf16.mxu0 %v496
        %1606 = vmatmul.mubr.bf16.gmra.mrb[0].mxu0 %v495
        %v1607 = vpop.f32.mrb[0].mxu0
        %v1608 = vadd.f32 %v648, %v1607
        %v1609 = vpop.f32.mrb[0].mxu0
        %v1610 = vadd.f32 %v652, %v1609
        %v1611 = vpop.f32.mrb[0].mxu0
        %v1612 = vadd.f32 %v648, %v1611
        %v1613 = vpop.f32.mrb[0].mxu0
        %v1614 = vadd.f32 %v652, %v1613
        %1615 = vmatprep.mubr.bf16.mxu0 %v500
        %1616 = vmatmul.mubr.bf16.gmra.mrb[0].mxu0 %v499
        %v1617 = vpop.f32.mrb[0].mxu0
        %v1618 = vadd.f32 %v648, %v1617
        %v1619 = vpop.f32.mrb[0].mxu0
        %v1620 = vadd.f32 %v652, %v1619
        %v1621 = vpop.f32.mrb[0].mxu0
        %v1622 = vadd.f32 %v648, %v1621
        %v1623 = vpop.f32.mrb[0].mxu0
        %v1624 = vadd.f32 %v652, %v1623
        %1625 = vmatprep.mubr.bf16.mxu0 %v504
        %1626 = vmatmul.mubr.bf16.gmra.mrb[0].mxu0 %v503
        %v1627 = vpop.f32.mrb[0].mxu0
        %v1628 = vadd.f32 %v648, %v1627
        %v1629 = vpop.f32.mrb[0].mxu0
        %v1630 = vadd.f32 %v652, %v1629
        %v1631 = vpop.f32.mrb[0].mxu0
        %v1632 = vadd.f32 %v648, %v1631
        %v1633 = vpop.f32.mrb[0].mxu0
        %v1634 = vadd.f32 %v652, %v1633
        %1635 = vdwg.mxu0
        %1636 = vmatprep.subr.bf16.mxu0 %v1108
        %1637 = vmatpush1.bf16.msra.mxu0 %v1107
        %1638 = vmatprep.subr.bf16.mxu0 %v1112
        %1639 = vmatpush1.bf16.msra.mxu0 %v1111
        %1640 = vmatprep.subr.bf16.mxu0 %v1116
        %1641 = vmatpush1.bf16.msra.mxu0 %v1115
        %1642 = vmatprep.subr.bf16.mxu0 %v1120
        %1643 = vmatpush1.bf16.msra.mxu0 %v1119
        %1644 = vmatprep.subr.bf16.mxu0 %v1124
        %1645 = vmatpush1.bf16.msra.mxu0 %v1123
        %1646 = vmatprep.subr.bf16.mxu0 %v1128
        %1647 = vmatpush1.bf16.msra.mxu0 %v1127
        %1648 = vmatprep.subr.bf16.mxu0 %v1132
        %1649 = vmatpush1.bf16.msra.mxu0 %v1131
        %1650 = vmatprep.subr.bf16.mxu0 %v1136
        %1651 = vmatpush1.bf16.msra.mxu0 %v1135
        %1652 = vmatprep.subr.bf16.mxu0 %v1140
        %1653 = vmatpush1.bf16.msra.mxu0 %v1139
        %1654 = vmatprep.subr.bf16.mxu0 %v1144
        %1655 = vmatpush1.bf16.msra.mxu0 %v1143
        %1656 = vmatprep.subr.bf16.mxu0 %v1148
        %1657 = vmatpush1.bf16.msra.mxu0 %v1147
        %1658 = vmatprep.subr.bf16.mxu0 %v1152
        %1659 = vmatpush1.bf16.msra.mxu0 %v1151
        %1660 = vmatprep.subr.bf16.mxu0 %v1156
        %1661 = vmatpush1.bf16.msra.mxu0 %v1155
        %1662 = vmatprep.subr.bf16.mxu0 %v1160
        %1663 = vmatpush1.bf16.msra.mxu0 %v1159
        %1664 = vmatprep.subr.bf16.mxu0 %v1164
        %1665 = vmatpush1.bf16.msra.mxu0 %v1163
        %1666 = vmatprep.subr.bf16.mxu0 %v1168
        %1667 = vmatpush1.bf16.msra.mxu0 %v1167
        %1668 = vmatprep.mubr.bf16.mxu0 %v478
        %1669 = vmatmul.mubr.bf16.gmra.mrb[0].mxu0 %v477
        %v1670 = vpop.f32.mrb[0].mxu0
        %v1671 = vadd.f32 %v1558, %v1670
        %v1672 = vpop.f32.mrb[0].mxu0
        %v1673 = vadd.f32 %v1560, %v1672
        %v1674 = vpop.f32.mrb[0].mxu0
        %v1675 = vadd.f32 %v1562, %v1674
        %v1676 = vpop.f32.mrb[0].mxu0
        %v1677 = vadd.f32 %v1564, %v1676
        %1678 = vmatprep.mubr.bf16.mxu0 %v482
        %1679 = vmatmul.mubr.bf16.gmra.mrb[0].mxu0 %v481
        %v1680 = vpop.f32.mrb[0].mxu0
        %v1681 = vadd.f32 %v1568, %v1680
        %v1682 = vpop.f32.mrb[0].mxu0
        %v1683 = vadd.f32 %v1570, %v1682
        %v1684 = vpop.f32.mrb[0].mxu0
        %v1685 = vadd.f32 %v1572, %v1684
        %v1686 = vpop.f32.mrb[0].mxu0
        %v1687 = vadd.f32 %v1574, %v1686
        %1688 = vmatprep.mubr.bf16.mxu0 %v486
        %1689 = vmatmul.mubr.bf16.gmra.mrb[0].mxu0 %v485
        %v1690 = vpop.f32.mrb[0].mxu0
        %v1691 = vadd.f32 %v1578, %v1690
        %v1692 = vpop.f32.mrb[0].mxu0
        %v1693 = vadd.f32 %v1580, %v1692
        %v1694 = vpop.f32.mrb[0].mxu0
        %v1695 = vadd.f32 %v1582, %v1694
        %v1696 = vpop.f32.mrb[0].mxu0
        %v1697 = vadd.f32 %v1584, %v1696
        %1698 = vmatprep.mubr.bf16.mxu0 %v490
        %1699 = vmatmul.mubr.bf16.gmra.mrb[0].mxu0 %v489
        %v1700 = vpop.f32.mrb[0].mxu0
        %v1701 = vadd.f32 %v1588, %v1700
        %v1702 = vpop.f32.mrb[0].mxu0
        %v1703 = vadd.f32 %v1590, %v1702
        %v1704 = vpop.f32.mrb[0].mxu0
        %v1705 = vadd.f32 %v1592, %v1704
        %v1706 = vpop.f32.mrb[0].mxu0
        %v1707 = vadd.f32 %v1594, %v1706
        %1708 = vmatprep.mubr.bf16.mxu0 %v494
        %1709 = vmatmul.mubr.bf16.gmra.mrb[0].mxu0 %v493
        %v1710 = vpop.f32.mrb[0].mxu0
        %v1711 = vadd.f32 %v1598, %v1710
        %v1712 = vpop.f32.mrb[0].mxu0
        %v1713 = vadd.f32 %v1600, %v1712
        %v1714 = vpop.f32.mrb[0].mxu0
        %v1715 = vadd.f32 %v1602, %v1714
        %v1716 = vpop.f32.mrb[0].mxu0
        %v1717 = vadd.f32 %v1604, %v1716
        %1718 = vmatprep.mubr.bf16.mxu0 %v498
        %1719 = vmatmul.mubr.bf16.gmra.mrb[0].mxu0 %v497
        %v1720 = vpop.f32.mrb[0].mxu0
        %v1721 = vadd.f32 %v1608, %v1720
        %v1722 = vpop.f32.mrb[0].mxu0
        %v1723 = vadd.f32 %v1610, %v1722
        %v1724 = vpop.f32.mrb[0].mxu0
        %v1725 = vadd.f32 %v1612, %v1724
        %v1726 = vpop.f32.mrb[0].mxu0
        %v1727 = vadd.f32 %v1614, %v1726
        %1728 = vmatprep.mubr.bf16.mxu0 %v502
        %1729 = vmatmul.mubr.bf16.gmra.mrb[0].mxu0 %v501
        %v1730 = vpop.f32.mrb[0].mxu0
        %v1731 = vadd.f32 %v1618, %v1730
        %v1732 = vpop.f32.mrb[0].mxu0
        %v1733 = vadd.f32 %v1620, %v1732
        %v1734 = vpop.f32.mrb[0].mxu0
        %v1735 = vadd.f32 %v1622, %v1734
        %v1736 = vpop.f32.mrb[0].mxu0
        %v1737 = vadd.f32 %v1624, %v1736
        %1738 = vmatprep.mubr.bf16.mxu0 %v506
        %1739 = vmatmul.mubr.bf16.gmra.mrb[0].mxu0 %v505
        %v1740 = vpop.f32.mrb[0].mxu0
        %v1741 = vadd.f32 %v1628, %v1740
        %v1742 = vpop.f32.mrb[0].mxu0
        %v1743 = vadd.f32 %v1630, %v1742
        %v1744 = vpop.f32.mrb[0].mxu0
        %v1745 = vadd.f32 %v1632, %v1744
        %v1746 = vpop.f32.mrb[0].mxu0
        %v1747 = vadd.f32 %v1634, %v1746
        %1748 = vdwg.mxu0
        %vm1749 = vcmp.ge.f32.partialorder %v1445, 0.0
        %vm1750 = vcmp.ge.f32.partialorder %v1447, 0.0
        %vm1751 = vcmp.ge.f32.partialorder %v1671, 0.0
        %vm1752 = vcmp.ge.f32.partialorder %v1673, 0.0
        %vm1753 = vcmp.ge.f32.partialorder %v1449, 0.0
        %vm1754 = vcmp.ge.f32.partialorder %v1451, 0.0
        %vm1755 = vcmp.ge.f32.partialorder %v1675, 0.0
        %vm1756 = vcmp.ge.f32.partialorder %v1677, 0.0
        %vm1757 = vcmp.ge.f32.partialorder %v1455, 0.0
        %vm1758 = vcmp.ge.f32.partialorder %v1457, 0.0
        %vm1759 = vcmp.ge.f32.partialorder %v1681, 0.0
        %vm1760 = vcmp.ge.f32.partialorder %v1683, 0.0
        %vm1761 = vcmp.ge.f32.partialorder %v1459, 0.0
        %vm1762 = vcmp.ge.f32.partialorder %v1461, 0.0
        %vm1763 = vcmp.ge.f32.partialorder %v1685, 0.0
        %vm1764 = vcmp.ge.f32.partialorder %v1687, 0.0
        %vm1765 = vcmp.ge.f32.partialorder %v1465, 0.0
        %vm1766 = vcmp.ge.f32.partialorder %v1467, 0.0
        %vm1767 = vcmp.ge.f32.partialorder %v1691, 0.0
        %vm1768 = vcmp.ge.f32.partialorder %v1693, 0.0
        %vm1769 = vcmp.ge.f32.partialorder %v1469, 0.0
        %vm1770 = vcmp.ge.f32.partialorder %v1471, 0.0
        %vm1771 = vcmp.ge.f32.partialorder %v1695, 0.0
        %vm1772 = vcmp.ge.f32.partialorder %v1697, 0.0
        %vm1773 = vcmp.ge.f32.partialorder %v1475, 0.0
        %vm1774 = vcmp.ge.f32.partialorder %v1477, 0.0
        %vm1775 = vcmp.ge.f32.partialorder %v1701, 0.0
        %vm1776 = vcmp.ge.f32.partialorder %v1703, 0.0
        %vm1777 = vcmp.ge.f32.partialorder %v1479, 0.0
        %vm1778 = vcmp.ge.f32.partialorder %v1481, 0.0
        %vm1779 = vcmp.ge.f32.partialorder %v1705, 0.0
        %vm1780 = vcmp.ge.f32.partialorder %v1707, 0.0
        %vm1781 = vcmp.ge.f32.partialorder %v1485, 0.0
        %vm1782 = vcmp.ge.f32.partialorder %v1487, 0.0
        %vm1783 = vcmp.ge.f32.partialorder %v1711, 0.0
        %vm1784 = vcmp.ge.f32.partialorder %v1713, 0.0
        %vm1785 = vcmp.ge.f32.partialorder %v1489, 0.0
        %vm1786 = vcmp.ge.f32.partialorder %v1491, 0.0
        %vm1787 = vcmp.ge.f32.partialorder %v1715, 0.0
        %vm1788 = vcmp.ge.f32.partialorder %v1717, 0.0
        %vm1789 = vcmp.ge.f32.partialorder %v1495, 0.0
        %vm1790 = vcmp.ge.f32.partialorder %v1497, 0.0
        %vm1791 = vcmp.ge.f32.partialorder %v1721, 0.0
        %vm1792 = vcmp.ge.f32.partialorder %v1723, 0.0
        %vm1793 = vcmp.ge.f32.partialorder %v1499, 0.0
        %vm1794 = vcmp.ge.f32.partialorder %v1501, 0.0
        %vm1795 = vcmp.ge.f32.partialorder %v1725, 0.0
        %vm1796 = vcmp.ge.f32.partialorder %v1727, 0.0
        %vm1797 = vcmp.ge.f32.partialorder %v1505, 0.0
        %vm1798 = vcmp.ge.f32.partialorder %v1507, 0.0
        %vm1799 = vcmp.ge.f32.partialorder %v1731, 0.0
        %vm1800 = vcmp.ge.f32.partialorder %v1733, 0.0
        %vm1801 = vcmp.ge.f32.partialorder %v1509, 0.0
        %vm1802 = vcmp.ge.f32.partialorder %v1511, 0.0
        %vm1803 = vcmp.ge.f32.partialorder %v1735, 0.0
        %vm1804 = vcmp.ge.f32.partialorder %v1737, 0.0
        %vm1805 = vcmp.ge.f32.partialorder %v1515, 0.0
        %vm1806 = vcmp.ge.f32.partialorder %v1517, 0.0
        %vm1807 = vcmp.ge.f32.partialorder %v1741, 0.0
        %vm1808 = vcmp.ge.f32.partialorder %v1743, 0.0
        %vm1809 = vcmp.ge.f32.partialorder %v1519, 0.0
        %vm1810 = vcmp.ge.f32.partialorder %v1521, 0.0
        %vm1811 = vcmp.ge.f32.partialorder %v1745, 0.0
        %vm1812 = vcmp.ge.f32.partialorder %v1747, 0.0
        %v1813 = vmul.f32 %v1445, 0.01
        %v1814 = vmul.f32 %v1447, 0.01
        %v1815 = vmul.f32 %v1671, 0.01
        %v1816 = vmul.f32 %v1673, 0.01
        %v1817 = vmul.f32 %v1449, 0.01
        %v1818 = vmul.f32 %v1451, 0.01
        %v1819 = vmul.f32 %v1675, 0.01
        %v1820 = vmul.f32 %v1677, 0.01
        %v1821 = vmul.f32 %v1455, 0.01
        %v1822 = vmul.f32 %v1457, 0.01
        %v1823 = vmul.f32 %v1681, 0.01
        %v1824 = vmul.f32 %v1683, 0.01
        %v1825 = vmul.f32 %v1459, 0.01
        %v1826 = vmul.f32 %v1461, 0.01
        %v1827 = vmul.f32 %v1685, 0.01
        %v1828 = vmul.f32 %v1687, 0.01
        %v1829 = vmul.f32 %v1465, 0.01
        %v1830 = vmul.f32 %v1467, 0.01
        %v1831 = vmul.f32 %v1691, 0.01
        %v1832 = vmul.f32 %v1693, 0.01
        %v1833 = vmul.f32 %v1469, 0.01
        %v1834 = vmul.f32 %v1471, 0.01
        %v1835 = vmul.f32 %v1695, 0.01
        %v1836 = vmul.f32 %v1697, 0.01
        %v1837 = vmul.f32 %v1475, 0.01
        %v1838 = vmul.f32 %v1477, 0.01
        %v1839 = vmul.f32 %v1701, 0.01
        %v1840 = vmul.f32 %v1703, 0.01
        %v1841 = vmul.f32 %v1479, 0.01
        %v1842 = vmul.f32 %v1481, 0.01
        %v1843 = vmul.f32 %v1705, 0.01
        %v1844 = vmul.f32 %v1707, 0.01
        %v1845 = vmul.f32 %v1485, 0.01
        %v1846 = vmul.f32 %v1487, 0.01
        %v1847 = vmul.f32 %v1711, 0.01
        %v1848 = vmul.f32 %v1713, 0.01
        %v1849 = vmul.f32 %v1489, 0.01
        %v1850 = vmul.f32 %v1491, 0.01
        %v1851 = vmul.f32 %v1715, 0.01
        %v1852 = vmul.f32 %v1717, 0.01
        %v1853 = vmul.f32 %v1495, 0.01
        %v1854 = vmul.f32 %v1497, 0.01
        %v1855 = vmul.f32 %v1721, 0.01
        %v1856 = vmul.f32 %v1723, 0.01
        %v1857 = vmul.f32 %v1499, 0.01
        %v1858 = vmul.f32 %v1501, 0.01
        %v1859 = vmul.f32 %v1725, 0.01
        %v1860 = vmul.f32 %v1727, 0.01
        %v1861 = vmul.f32 %v1505, 0.01
        %v1862 = vmul.f32 %v1507, 0.01
        %v1863 = vmul.f32 %v1731, 0.01
        %v1864 = vmul.f32 %v1733, 0.01
        %v1865 = vmul.f32 %v1509, 0.01
        %v1866 = vmul.f32 %v1511, 0.01
        %v1867 = vmul.f32 %v1735, 0.01
        %v1868 = vmul.f32 %v1737, 0.01
        %v1869 = vmul.f32 %v1515, 0.01
        %v1870 = vmul.f32 %v1517, 0.01
        %v1871 = vmul.f32 %v1741, 0.01
        %v1872 = vmul.f32 %v1743, 0.01
        %v1873 = vmul.f32 %v1519, 0.01
        %v1874 = vmul.f32 %v1521, 0.01
        %v1875 = vmul.f32 %v1745, 0.01
        %v1876 = vmul.f32 %v1747, 0.01
        %v1877 = vsel %vm1749, %v1445, %v1813
        %v1878 = vsel %vm1750, %v1447, %v1814
        %v1879 = vsel %vm1751, %v1671, %v1815
        %v1880 = vsel %vm1752, %v1673, %v1816
        %v1881 = vsel %vm1753, %v1449, %v1817
        %v1882 = vsel %vm1754, %v1451, %v1818
        %v1883 = vsel %vm1755, %v1675, %v1819
        %v1884 = vsel %vm1756, %v1677, %v1820
        %v1885 = vsel %vm1757, %v1455, %v1821
        %v1886 = vsel %vm1758, %v1457, %v1822
        %v1887 = vsel %vm1759, %v1681, %v1823
        %v1888 = vsel %vm1760, %v1683, %v1824
        %v1889 = vsel %vm1761, %v1459, %v1825
        %v1890 = vsel %vm1762, %v1461, %v1826
        %v1891 = vsel %vm1763, %v1685, %v1827
        %v1892 = vsel %vm1764, %v1687, %v1828
        %v1893 = vsel %vm1765, %v1465, %v1829
        %v1894 = vsel %vm1766, %v1467, %v1830
        %v1895 = vsel %vm1767, %v1691, %v1831
        %v1896 = vsel %vm1768, %v1693, %v1832
        %v1897 = vsel %vm1769, %v1469, %v1833
        %v1898 = vsel %vm1770, %v1471, %v1834
        %v1899 = vsel %vm1771, %v1695, %v1835
        %v1900 = vsel %vm1772, %v1697, %v1836
        %v1901 = vsel %vm1773, %v1475, %v1837
        %v1902 = vsel %vm1774, %v1477, %v1838
        %v1903 = vsel %vm1775, %v1701, %v1839
        %v1904 = vsel %vm1776, %v1703, %v1840
        %v1905 = vsel %vm1777, %v1479, %v1841
        %v1906 = vsel %vm1778, %v1481, %v1842
        %v1907 = vsel %vm1779, %v1705, %v1843
        %v1908 = vsel %vm1780, %v1707, %v1844
        %v1909 = vsel %vm1781, %v1485, %v1845
        %v1910 = vsel %vm1782, %v1487, %v1846
        %v1911 = vsel %vm1783, %v1711, %v1847
        %v1912 = vsel %vm1784, %v1713, %v1848
        %v1913 = vsel %vm1785, %v1489, %v1849
        %v1914 = vsel %vm1786, %v1491, %v1850
        %v1915 = vsel %vm1787, %v1715, %v1851
        %v1916 = vsel %vm1788, %v1717, %v1852
        %v1917 = vsel %vm1789, %v1495, %v1853
        %v1918 = vsel %vm1790, %v1497, %v1854
        %v1919 = vsel %vm1791, %v1721, %v1855
        %v1920 = vsel %vm1792, %v1723, %v1856
        %v1921 = vsel %vm1793, %v1499, %v1857
        %v1922 = vsel %vm1794, %v1501, %v1858
        %v1923 = vsel %vm1795, %v1725, %v1859
        %v1924 = vsel %vm1796, %v1727, %v1860
        %v1925 = vsel %vm1797, %v1505, %v1861
        %v1926 = vsel %vm1798, %v1507, %v1862
        %v1927 = vsel %vm1799, %v1731, %v1863
        %v1928 = vsel %vm1800, %v1733, %v1864
        %v1929 = vsel %vm1801, %v1509, %v1865
        %v1930 = vsel %vm1802, %v1511, %v1866
        %v1931 = vsel %vm1803, %v1735, %v1867
        %v1932 = vsel %vm1804, %v1737, %v1868
        %v1933 = vsel %vm1805, %v1515, %v1869
        %v1934 = vsel %vm1806, %v1517, %v1870
        %v1935 = vsel %vm1807, %v1741, %v1871
        %v1936 = vsel %vm1808, %v1743, %v1872
        %v1937 = vsel %vm1809, %v1519, %v1873
        %v1938 = vsel %vm1810, %v1521, %v1874
        %v1939 = vsel %vm1811, %v1745, %v1875
        %v1940 = vsel %vm1812, %v1747, %v1876
        %1941 = vst [vmem:[#allocation2] sm:$0xff] %v1877
        %1942 = vst [vmem:[#allocation2 + $0x8] sm:$0xff] %v1878
        %1943 = vst [vmem:[#allocation2 + $0x10] sm:$0xff] %v1879
        %1944 = vst [vmem:[#allocation2 + $0x18] sm:$0xff] %v1880
        %1945 = vst [vmem:[#allocation2 + $0x20] sm:$0xff] %v1881
        %1946 = vst [vmem:[#allocation2 + $0x28] sm:$0xff] %v1882
        %1947 = vst [vmem:[#allocation2 + $0x30] sm:$0xff] %v1883
        %1948 = vst [vmem:[#allocation2 + $0x38] sm:$0xff] %v1884
        %1949 = vst [vmem:[#allocation2 + $0x40] sm:$0xff] %v1885
        %1950 = vst [vmem:[#allocation2 + $0x48] sm:$0xff] %v1886
        %1951 = vst [vmem:[#allocation2 + $0x50] sm:$0xff] %v1887
        %1952 = vst [vmem:[#allocation2 + $0x58] sm:$0xff] %v1888
        %1953 = vst [vmem:[#allocation2 + $0x60] sm:$0xff] %v1889
        %1954 = vst [vmem:[#allocation2 + $0x68] sm:$0xff] %v1890
        %1955 = vst [vmem:[#allocation2 + $0x70] sm:$0xff] %v1891
        %1956 = vst [vmem:[#allocation2 + $0x78] sm:$0xff] %v1892
        %1957 = vst [vmem:[#allocation2 + $0x80] sm:$0xff] %v1893
        %1958 = vst [vmem:[#allocation2 + $0x88] sm:$0xff] %v1894
        %1959 = vst [vmem:[#allocation2 + $0x90] sm:$0xff] %v1895
        %1960 = vst [vmem:[#allocation2 + $0x98] sm:$0xff] %v1896
        %1961 = vst [vmem:[#allocation2 + $0xa0] sm:$0xff] %v1897
        %1962 = vst [vmem:[#allocation2 + $0xa8] sm:$0xff] %v1898
        %1963 = vst [vmem:[#allocation2 + $0xb0] sm:$0xff] %v1899
        %1964 = vst [vmem:[#allocation2 + $0xb8] sm:$0xff] %v1900
        %1965 = vst [vmem:[#allocation2 + $0xc0] sm:$0xff] %v1901
        %1966 = vst [vmem:[#allocation2 + $0xc8] sm:$0xff] %v1902
        %1967 = vst [vmem:[#allocation2 + $0xd0] sm:$0xff] %v1903
        %1968 = vst [vmem:[#allocation2 + $0xd8] sm:$0xff] %v1904
        %1969 = vst [vmem:[#allocation2 + $0xe0] sm:$0xff] %v1905
        %1970 = vst [vmem:[#allocation2 + $0xe8] sm:$0xff] %v1906
        %1971 = vst [vmem:[#allocation2 + $0xf0] sm:$0xff] %v1907
        %1972 = vst [vmem:[#allocation2 + $0xf8] sm:$0xff] %v1908
        %1973 = vst [vmem:[#allocation2 + $0x100] sm:$0xff] %v1909
        %1974 = vst [vmem:[#allocation2 + $0x108] sm:$0xff] %v1910
        %1975 = vst [vmem:[#allocation2 + $0x110] sm:$0xff] %v1911
        %1976 = vst [vmem:[#allocation2 + $0x118] sm:$0xff] %v1912
        %1977 = vst [vmem:[#allocation2 + $0x120] sm:$0xff] %v1913
        %1978 = vst [vmem:[#allocation2 + $0x128] sm:$0xff] %v1914
        %1979 = vst [vmem:[#allocation2 + $0x130] sm:$0xff] %v1915
        %1980 = vst [vmem:[#allocation2 + $0x138] sm:$0xff] %v1916
        %1981 = vst [vmem:[#allocation2 + $0x140] sm:$0xff] %v1917
        %1982 = vst [vmem:[#allocation2 + $0x148] sm:$0xff] %v1918
        %1983 = vst [vmem:[#allocation2 + $0x150] sm:$0xff] %v1919
        %1984 = vst [vmem:[#allocation2 + $0x158] sm:$0xff] %v1920
        %1985 = vst [vmem:[#allocation2 + $0x160] sm:$0xff] %v1921
        %1986 = vst [vmem:[#allocation2 + $0x168] sm:$0xff] %v1922
        %1987 = vst [vmem:[#allocation2 + $0x170] sm:$0xff] %v1923
        %1988 = vst [vmem:[#allocation2 + $0x178] sm:$0xff] %v1924
        %1989 = vst [vmem:[#allocation2 + $0x180] sm:$0xff] %v1925
        %1990 = vst [vmem:[#allocation2 + $0x188] sm:$0xff] %v1926
        %1991 = vst [vmem:[#allocation2 + $0x190] sm:$0xff] %v1927
        %1992 = vst [vmem:[#allocation2 + $0x198] sm:$0xff] %v1928
        %1993 = vst [vmem:[#allocation2 + $0x1a0] sm:$0xff] %v1929
        %1994 = vst [vmem:[#allocation2 + $0x1a8] sm:$0xff] %v1930
        %1995 = vst [vmem:[#allocation2 + $0x1b0] sm:$0xff] %v1931
        %1996 = vst [vmem:[#allocation2 + $0x1b8] sm:$0xff] %v1932
        %1997 = vst [vmem:[#allocation2 + $0x1c0] sm:$0xff] %v1933
        %1998 = vst [vmem:[#allocation2 + $0x1c8] sm:$0xff] %v1934
        %1999 = vst [vmem:[#allocation2 + $0x1d0] sm:$0xff] %v1935
        %2000 = vst [vmem:[#allocation2 + $0x1d8] sm:$0xff] %v1936
        %2001 = vst [vmem:[#allocation2 + $0x1e0] sm:$0xff] %v1937
        %2002 = vst [vmem:[#allocation2 + $0x1e8] sm:$0xff] %v1938
        %2003 = vst [vmem:[#allocation2 + $0x1f0] sm:$0xff] %v1939
        %2004 = vst [vmem:[#allocation2 + $0x1f8] sm:$0xff] %v1940
        %p2005 = scmp.eq.s32.totalorder %s28, 7
        // Predicated region
        $region49: #{tpu_custom_call.1} parent=31 // pred_check
          %p2006 = pneg %p2005
        $region50: #{tpu_custom_call.1} parent=31 // pred_check_branch
          %2008 = sbr.rel (%p2006) target = $region52
        $region51: #{tpu_custom_call.1} parent=31 // pred_region
          %v2009 = vld [vmem:[#allocation2] sm:$0xff]
          %v2010 = vld [vmem:[#allocation2 + $0x8] sm:$0xff]
          %v2011 = vld [vmem:[#allocation2 + $0x10] sm:$0xff]
          %v2012 = vld [vmem:[#allocation2 + $0x18] sm:$0xff]
          %v2013 = vld [vmem:[#allocation2 + $0x20] sm:$0xff]
          %v2014 = vld [vmem:[#allocation2 + $0x28] sm:$0xff]
          %v2015 = vld [vmem:[#allocation2 + $0x30] sm:$0xff]
          %v2016 = vld [vmem:[#allocation2 + $0x38] sm:$0xff]
          %v2017 = vld [vmem:[#allocation2 + $0x40] sm:$0xff]
          %v2018 = vld [vmem:[#allocation2 + $0x48] sm:$0xff]
          %v2019 = vld [vmem:[#allocation2 + $0x50] sm:$0xff]
          %v2020 = vld [vmem:[#allocation2 + $0x58] sm:$0xff]
          %v2021 = vld [vmem:[#allocation2 + $0x60] sm:$0xff]
          %v2022 = vld [vmem:[#allocation2 + $0x68] sm:$0xff]
          %v2023 = vld [vmem:[#allocation2 + $0x70] sm:$0xff]
          %v2024 = vld [vmem:[#allocation2 + $0x78] sm:$0xff]
          %v2025 = vld [vmem:[#allocation2 + $0x80] sm:$0xff]
          %v2026 = vld [vmem:[#allocation2 + $0x88] sm:$0xff]
          %v2027 = vld [vmem:[#allocation2 + $0x90] sm:$0xff]
          %v2028 = vld [vmem:[#allocation2 + $0x98] sm:$0xff]
          %v2029 = vld [vmem:[#allocation2 + $0xa0] sm:$0xff]
          %v2030 = vld [vmem:[#allocation2 + $0xa8] sm:$0xff]
          %v2031 = vld [vmem:[#allocation2 + $0xb0] sm:$0xff]
          %v2032 = vld [vmem:[#allocation2 + $0xb8] sm:$0xff]
          %v2033 = vld [vmem:[#allocation2 + $0xc0] sm:$0xff]
          %v2034 = vld [vmem:[#allocation2 + $0xc8] sm:$0xff]
          %v2035 = vld [vmem:[#allocation2 + $0xd0] sm:$0xff]
          %v2036 = vld [vmem:[#allocation2 + $0xd8] sm:$0xff]
          %v2037 = vld [vmem:[#allocation2 + $0xe0] sm:$0xff]
          %v2038 = vld [vmem:[#allocation2 + $0xe8] sm:$0xff]
          %v2039 = vld [vmem:[#allocation2 + $0xf0] sm:$0xff]
          %v2040 = vld [vmem:[#allocation2 + $0xf8] sm:$0xff]
          %v2041 = vld [vmem:[#allocation2 + $0x100] sm:$0xff]
          %v2042 = vld [vmem:[#allocation2 + $0x108] sm:$0xff]
          %v2043 = vld [vmem:[#allocation2 + $0x110] sm:$0xff]
          %v2044 = vld [vmem:[#allocation2 + $0x118] sm:$0xff]
          %v2045 = vld [vmem:[#allocation2 + $0x120] sm:$0xff]
          %v2046 = vld [vmem:[#allocation2 + $0x128] sm:$0xff]
          %v2047 = vld [vmem:[#allocation2 + $0x130] sm:$0xff]
          %v2048 = vld [vmem:[#allocation2 + $0x138] sm:$0xff]
          %v2049 = vld [vmem:[#allocation2 + $0x140] sm:$0xff]
          %v2050 = vld [vmem:[#allocation2 + $0x148] sm:$0xff]
          %v2051 = vld [vmem:[#allocation2 + $0x150] sm:$0xff]
          %v2052 = vld [vmem:[#allocation2 + $0x158] sm:$0xff]
          %v2053 = vld [vmem:[#allocation2 + $0x160] sm:$0xff]
          %v2054 = vld [vmem:[#allocation2 + $0x168] sm:$0xff]
          %v2055 = vld [vmem:[#allocation2 + $0x170] sm:$0xff]
          %v2056 = vld [vmem:[#allocation2 + $0x178] sm:$0xff]
          %v2057 = vld [vmem:[#allocation2 + $0x180] sm:$0xff]
          %v2058 = vld [vmem:[#allocation2 + $0x188] sm:$0xff]
          %v2059 = vld [vmem:[#allocation2 + $0x190] sm:$0xff]
          %v2060 = vld [vmem:[#allocation2 + $0x198] sm:$0xff]
          %v2061 = vld [vmem:[#allocation2 + $0x1a0] sm:$0xff]
          %v2062 = vld [vmem:[#allocation2 + $0x1a8] sm:$0xff]
          %v2063 = vld [vmem:[#allocation2 + $0x1b0] sm:$0xff]
          %v2064 = vld [vmem:[#allocation2 + $0x1b8] sm:$0xff]
          %v2065 = vld [vmem:[#allocation2 + $0x1c0] sm:$0xff]
          %v2066 = vld [vmem:[#allocation2 + $0x1c8] sm:$0xff]
          %v2067 = vld [vmem:[#allocation2 + $0x1d0] sm:$0xff]
          %v2068 = vld [vmem:[#allocation2 + $0x1d8] sm:$0xff]
          %v2069 = vld [vmem:[#allocation2 + $0x1e0] sm:$0xff]
          %v2070 = vld [vmem:[#allocation2 + $0x1e8] sm:$0xff]
          %v2071 = vld [vmem:[#allocation2 + $0x1f0] sm:$0xff]
          %v2072 = vld [vmem:[#allocation2 + $0x1f8] sm:$0xff]
          %2073 = vst [vmem:[%s276] sm:$0xff] %v2009
          %2074 = vst [vmem:[%s276 + $0x8] sm:$0xff] %v2010
          %2075 = vst [vmem:[%s276 + $0x10] sm:$0xff] %v2011
          %2076 = vst [vmem:[%s276 + $0x18] sm:$0xff] %v2012
          %2077 = vst [vmem:[%s276 + $0x20] sm:$0xff] %v2013
          %2078 = vst [vmem:[%s276 + $0x28] sm:$0xff] %v2014
          %2079 = vst [vmem:[%s276 + $0x30] sm:$0xff] %v2015
          %2080 = vst [vmem:[%s276 + $0x38] sm:$0xff] %v2016
          %2081 = vst [vmem:[%s276 + $0x40] sm:$0xff] %v2017
          %2082 = vst [vmem:[%s276 + $0x48] sm:$0xff] %v2018
          %2083 = vst [vmem:[%s276 + $0x50] sm:$0xff] %v2019
          %2084 = vst [vmem:[%s276 + $0x58] sm:$0xff] %v2020
          %2085 = vst [vmem:[%s276 + $0x60] sm:$0xff] %v2021
          %2086 = vst [vmem:[%s276 + $0x68] sm:$0xff] %v2022
          %2087 = vst [vmem:[%s276 + $0x70] sm:$0xff] %v2023
          %2088 = vst [vmem:[%s276 + $0x78] sm:$0xff] %v2024
          %2089 = vst [vmem:[%s276 + $0x80] sm:$0xff] %v2025
          %2090 = vst [vmem:[%s276 + $0x88] sm:$0xff] %v2026
          %2091 = vst [vmem:[%s276 + $0x90] sm:$0xff] %v2027
          %2092 = vst [vmem:[%s276 + $0x98] sm:$0xff] %v2028
          %2093 = vst [vmem:[%s276 + $0xa0] sm:$0xff] %v2029
          %2094 = vst [vmem:[%s276 + $0xa8] sm:$0xff] %v2030
          %2095 = vst [vmem:[%s276 + $0xb0] sm:$0xff] %v2031
          %2096 = vst [vmem:[%s276 + $0xb8] sm:$0xff] %v2032
          %2097 = vst [vmem:[%s276 + $0xc0] sm:$0xff] %v2033
          %2098 = vst [vmem:[%s276 + $0xc8] sm:$0xff] %v2034
          %2099 = vst [vmem:[%s276 + $0xd0] sm:$0xff] %v2035
          %2100 = vst [vmem:[%s276 + $0xd8] sm:$0xff] %v2036
          %2101 = vst [vmem:[%s276 + $0xe0] sm:$0xff] %v2037
          %2102 = vst [vmem:[%s276 + $0xe8] sm:$0xff] %v2038
          %2103 = vst [vmem:[%s276 + $0xf0] sm:$0xff] %v2039
          %2104 = vst [vmem:[%s276 + $0xf8] sm:$0xff] %v2040
          %2105 = vst [vmem:[%s276 + $0x100] sm:$0xff] %v2041
          %2106 = vst [vmem:[%s276 + $0x108] sm:$0xff] %v2042
          %2107 = vst [vmem:[%s276 + $0x110] sm:$0xff] %v2043
          %2108 = vst [vmem:[%s276 + $0x118] sm:$0xff] %v2044
          %2109 = vst [vmem:[%s276 + $0x120] sm:$0xff] %v2045
          %2110 = vst [vmem:[%s276 + $0x128] sm:$0xff] %v2046
          %2111 = vst [vmem:[%s276 + $0x130] sm:$0xff] %v2047
          %2112 = vst [vmem:[%s276 + $0x138] sm:$0xff] %v2048
          %2113 = vst [vmem:[%s276 + $0x140] sm:$0xff] %v2049
          %2114 = vst [vmem:[%s276 + $0x148] sm:$0xff] %v2050
          %2115 = vst [vmem:[%s276 + $0x150] sm:$0xff] %v2051
          %2116 = vst [vmem:[%s276 + $0x158] sm:$0xff] %v2052
          %2117 = vst [vmem:[%s276 + $0x160] sm:$0xff] %v2053
          %2118 = vst [vmem:[%s276 + $0x168] sm:$0xff] %v2054
          %2119 = vst [vmem:[%s276 + $0x170] sm:$0xff] %v2055
          %2120 = vst [vmem:[%s276 + $0x178] sm:$0xff] %v2056
          %2121 = vst [vmem:[%s276 + $0x180] sm:$0xff] %v2057
          %2122 = vst [vmem:[%s276 + $0x188] sm:$0xff] %v2058
          %2123 = vst [vmem:[%s276 + $0x190] sm:$0xff] %v2059
          %2124 = vst [vmem:[%s276 + $0x198] sm:$0xff] %v2060
          %2125 = vst [vmem:[%s276 + $0x1a0] sm:$0xff] %v2061
          %2126 = vst [vmem:[%s276 + $0x1a8] sm:$0xff] %v2062
          %2127 = vst [vmem:[%s276 + $0x1b0] sm:$0xff] %v2063
          %2128 = vst [vmem:[%s276 + $0x1b8] sm:$0xff] %v2064
          %2129 = vst [vmem:[%s276 + $0x1c0] sm:$0xff] %v2065
          %2130 = vst [vmem:[%s276 + $0x1c8] sm:$0xff] %v2066
          %2131 = vst [vmem:[%s276 + $0x1d0] sm:$0xff] %v2067
          %2132 = vst [vmem:[%s276 + $0x1d8] sm:$0xff] %v2068
          %2133 = vst [vmem:[%s276 + $0x1e0] sm:$0xff] %v2069
          %2134 = vst [vmem:[%s276 + $0x1e8] sm:$0xff] %v2070
          %2135 = vst [vmem:[%s276 + $0x1f0] sm:$0xff] %v2071
          %2136 = vst [vmem:[%s276 + $0x1f8] sm:$0xff] %v2072
        $region52: #{tpu_custom_call.1} parent=31 // pred_fallthru
          _
        %s2137 = sand.u32 %s121, 1
        %s2138 = scalar_lea.sflag [#allocation5], %s2137
        %s2139 = sand.u32 %s121, 1
        %s2140 = smul.addr %s2139, 512
        %s2141 = scalar_lea.vmem [#allocation9], %s2140
        // Predicated region
        $region53: #{tpu_custom_call.1} parent=31 // pred_check
          %p2142 = pneg %p131
        $region54: #{tpu_custom_call.1} parent=31 // pred_check_branch
          %2144 = sbr.rel (%p2142) target = $region56
        $region55: #{tpu_custom_call.1} parent=31 // pred_region
          %s2145 = smul.u32 16, %s27
          %s2147 = ssub.s32 8192, 8192
          %2148 = vsyncadd %s2138, %s2147
          %s2149 = smul.addr %s2145, 4
          %s2150 = smul.addr %s2149, 128
          %s2151 = scalar_lea.hbm %s3, %s2150
          %s2152 = sshll.u32 %s2141, 4
          %s2153 = int_to_ptr.vmem [resolvable:$true] %s2152
          %2158 = dma.vmem_to_hbm [thread:$0]  %s2153, 8192, %s2151, %s2138, 512, 512, 32
        $region56: #{tpu_custom_call.1} parent=31 // pred_fallthru
          _
      $region32: #{tpu_custom_call.1} parent=5 // pred_fallthru
        _
      %p2159 = scmp.le.s32.totalorder 2, %s18
      // Predicated region
      $region57: #{tpu_custom_call.1} parent=5 // pred_check
        %p2160 = pneg %p2159
      $region58: #{tpu_custom_call.1} parent=5 // pred_check_branch
        %2162 = sbr.rel (%p2160) target = $region60
      $region59: #{tpu_custom_call.1} parent=5 // pred_region
        %s2163 = ssub.s32 %s18, 2
        // Predicated region
        $region61: #{tpu_custom_call.1} parent=59 // pred_check
          %p2164 = pneg %p137
        $region62: #{tpu_custom_call.1} parent=59 // pred_check_branch
          %2166 = sbr.rel (%p2164) target = $region64
        $region63: #{tpu_custom_call.1} parent=59 // pred_region
          %s2167 = sand.u32 %s122, 1
          %s2168 = scalar_lea.sflag [#allocation5], %s2167
          %s2169 = sand.u32 %s122, 1
          %s2170 = smul.addr %s2169, 512
          %s2171 = scalar_lea.vmem [#allocation9], %s2170
          %2172 = dma.done %s2168, 8192
        $region64: #{tpu_custom_call.1} parent=59 // pred_fallthru
          _
      $region60: #{tpu_custom_call.1} parent=5 // pred_fallthru
        _
    $region6: #{tpu_custom_call.1} parent=1 // loop_footer
      %s22 = sadd.s32 1, %s18
    $region7: #{tpu_custom_call.1} parent=1 // loop_footer_branch
      %17 = sbr.rel target = $region3
    $region8: #{tpu_custom_call.1} parent=1 // loop_exit
      _
    %2173 = vsyncpa [#allocation4], 1
    %s2174 = scalar_lea.sflag [#allocation4], 1
    %2175 = vsyncpa %s2174, 1
    %2176 = vsyncpa [#allocation7], 1
    %s2177 = scalar_lea.sflag [#allocation7], 1
    %2178 = vsyncpa %s2177, 1
    %2179 = vsyncpa [#allocation5], 1
    %s2180 = scalar_lea.sflag [#allocation5], 1
    %2181 = vsyncpa %s2180, 1

</llo_original>
